<compile_context>
chip_gen: v6e
topology: v6e:2x2x1
jax: 0.10.0
libtpu: 0.0.40
codegen_flags: <defaults>
</compile_context>

<pallas_src>
import jax
import jax.numpy as jnp
from jax.experimental import pallas as pl
from jax.experimental.pallas import tpu as pltpu


def simclr_kernel(x_ref, wbb_ref, bbb_ref, w1_ref, b1_ref, w2_ref, b2_ref, z_ref):
    # Activations cast to bf16 for the MXU; accumulate in f32; elementwise
    # bias + ReLU kept in f32 (portable across v5e/v6e/v7x VPUs).
    x = x_ref[...].astype(jnp.bfloat16)

    # Backbone stand-in: linear -> ReLU -> (TB, 512) features.
    feat = jnp.dot(x, wbb_ref[...], preferred_element_type=jnp.float32)
    feat = jnp.maximum(feat + bbb_ref[...], 0.0)

    # SimCLRProjectionHead(512, 512, 128): Linear -> ReLU -> Linear.
    h = jnp.dot(feat.astype(jnp.bfloat16), w1_ref[...],
                preferred_element_type=jnp.float32)
    h = jnp.maximum(h + b1_ref[...], 0.0)

    z = jnp.dot(h.astype(jnp.bfloat16), w2_ref[...],
                preferred_element_type=jnp.float32)
    z_ref[...] = (z + b2_ref[...]).astype(z_ref.dtype)


def _round_up(x, m):
    return ((x + m - 1) // m) * m


def simclr_forward(x_nchw, params, *, tb=None):
    """x_nchw: (B, C, H, W) float32.  Returns z: (B, 128) float32."""
    B = x_nchw.shape[0]
    x_flat = x_nchw.reshape(B, -1).astype(jnp.float32)  # flatten(start_dim=1)
    in_dim = x_flat.shape[1]

    wbb, bbb, w1, b1, w2, b2 = params

    # Batch tile: 128 rows once the batch is big enough (MXU-friendly),
    # otherwise the smallest sublane-aligned tile (f32 => multiple of 8).
    if tb is None:
        tb = 128 if B >= 128 else _round_up(B, 8)
    Bp = _round_up(B, tb)
    if Bp != B:
        x_flat = jnp.pad(x_flat, ((0, Bp - B), (0, 0)))

    # bf16 weights: halves weight DMA bytes and feeds the bf16-native MXU.
    wbb_bf = wbb.astype(jnp.bfloat16)
    w1_bf = w1.astype(jnp.bfloat16)
    w2_bf = w2.astype(jnp.bfloat16)

    grid = (Bp // tb,)

    z_pad = pl.pallas_call(
        simclr_kernel,
        out_shape=jax.ShapeDtypeStruct((Bp, 128), jnp.float32),
        grid_spec=pltpu.PrefetchScalarGridSpec(
            num_scalar_prefetch=0,
            grid=grid,
            in_specs=[
                # Activations: tiled along the batch grid axis.
                pl.BlockSpec((tb, in_dim), lambda i: (i, 0)),
                # Weights / biases: weight-stationary (constant index_map).
                pl.BlockSpec((in_dim, 512), lambda i: (0, 0)),
                pl.BlockSpec((1, 512), lambda i: (0, 0)),
                pl.BlockSpec((512, 512), lambda i: (0, 0)),
                pl.BlockSpec((1, 512), lambda i: (0, 0)),
                pl.BlockSpec((512, 128), lambda i: (0, 0)),
                pl.BlockSpec((1, 128), lambda i: (0, 0)),
            ],
            # Lane-dense output: 128 feature dim last => full unmasked stores.
            out_specs=pl.BlockSpec((tb, 128), lambda i: (i, 0)),
        ),
        compiler_params=pltpu.CompilerParams(
            dimension_semantics=("parallel",),   # megacore shard on v7x
            vmem_limit_bytes=16 << 20,
        ),
    )(x_flat, wbb_bf, bbb, w1_bf, b1, w2_bf, b2)

    return z_pad[:B]


def init_params(key, in_dim):
    """Deterministic parameter init (PyTorch-ish uniform fan-in scaling)."""
    ks = jax.random.split(key, 6)

    def uniform(k, shape, fan_in):
        bound = 1.0 / jnp.sqrt(fan_in)
        return jax.random.uniform(k, shape, jnp.float32, -bound, bound)

    wbb = uniform(ks[0], (in_dim, 512), in_dim)
    bbb = uniform(ks[1], (1, 512), in_dim)
    w1 = uniform(ks[2], (512, 512), 512)
    b1 = uniform(ks[3], (1, 512), 512)
    w2 = uniform(ks[4], (512, 128), 512)
    b2 = uniform(ks[5], (1, 128), 512)
    return wbb, bbb, w1, b1, w2, b2


if __name__ == "__main__":
    key = jax.random.PRNGKey(0)
    k_x, k_p = jax.random.split(key)

    B, C, H, W = 2, 3, 16, 16          # small NCHW input, ResNet-style 3 channels
    x = jax.random.normal(k_x, (B, C, H, W), jnp.float32)
    params = init_params(k_p, C * H * W)

    z = simclr_forward(x, params)
    z = jax.block_until_ready(z)
    assert z.shape == (B, 128) and z.dtype == jnp.float32
    assert bool(jnp.all(jnp.isfinite(z)))
    print("KERNEL_OK")
</pallas_src>

<mosaic_0001>
module attributes {stable_mosaic.version = 11 : i64} {
  func.func @simclr_kernel(%arg0: i32, %arg1: memref<8x768xf32, #tpu.memory_space<vmem>>, %arg2: memref<768x512xbf16, #tpu.memory_space<vmem>>, %arg3: memref<1x512xf32, #tpu.memory_space<vmem>>, %arg4: memref<512x512xbf16, #tpu.memory_space<vmem>>, %arg5: memref<1x512xf32, #tpu.memory_space<vmem>>, %arg6: memref<512x128xbf16, #tpu.memory_space<vmem>>, %arg7: memref<1x128xf32, #tpu.memory_space<vmem>>, %arg8: memref<8x128xf32, #tpu.memory_space<vmem>>) attributes {dimension_semantics = [#tpu.dimension_semantics<parallel>], iteration_bounds = array<i64: 1>, scalar_prefetch = 0 : i64, scratch_operands = 0 : i64, tpu.core_type = #tpu.core_type<tc>, window_params = [{transform_indices = @transform_0, window_bounds = array<i64: 8, 768>}, {pipeline_mode = #tpu.pipeline_mode<synchronous>, transform_indices = @transform_1, window_bounds = array<i64: 768, 512>}, {pipeline_mode = #tpu.pipeline_mode<synchronous>, transform_indices = @transform_2, window_bounds = array<i64: 1, 512>}, {pipeline_mode = #tpu.pipeline_mode<synchronous>, transform_indices = @transform_3, window_bounds = array<i64: 512, 512>}, {pipeline_mode = #tpu.pipeline_mode<synchronous>, transform_indices = @transform_4, window_bounds = array<i64: 1, 512>}, {pipeline_mode = #tpu.pipeline_mode<synchronous>, transform_indices = @transform_5, window_bounds = array<i64: 512, 128>}, {pipeline_mode = #tpu.pipeline_mode<synchronous>, transform_indices = @transform_6, window_bounds = array<i64: 1, 128>}, {transform_indices = @transform_7, window_bounds = array<i64: 8, 128>}]} {
    %c0 = arith.constant 0 : index
    %c0_0 = arith.constant 0 : index
    %0 = vector.load %arg1[%c0, %c0_0] : memref<8x768xf32, #tpu.memory_space<vmem>>, vector<8x768xf32>
    %1 = arith.truncf %0 : vector<8x768xf32> to vector<8x768xbf16>
    %c0_1 = arith.constant 0 : index
    %c0_2 = arith.constant 0 : index
    %2 = vector.load %arg2[%c0_1, %c0_2] : memref<768x512xbf16, #tpu.memory_space<vmem>>, vector<768x512xbf16>
    %cst = arith.constant dense<0.000000e+00> : vector<8x512xf32>
    %3 = tpu.matmul %1, %2, %cst {dimension_numbers = #tpu.dot_dimension_numbers<[1], [0], [0], [1], [0, 0, 1, 1], [], []>} : vector<8x768xbf16>, vector<768x512xbf16>, vector<8x512xf32> -> vector<8x512xf32>
    %c0_3 = arith.constant 0 : index
    %c0_4 = arith.constant 0 : index
    %4 = vector.load %arg3[%c0_3, %c0_4] : memref<1x512xf32, #tpu.memory_space<vmem>>, vector<1x512xf32>
    %5 = vector.broadcast %4 : vector<1x512xf32> to vector<8x512xf32>
    %6 = arith.addf %3, %5 : vector<8x512xf32>
    %cst_5 = arith.constant 0.000000e+00 : f32
    %7 = vector.broadcast %cst_5 : f32 to vector<8x512xf32>
    %8 = arith.maximumf %6, %7 : vector<8x512xf32>
    %9 = arith.truncf %8 : vector<8x512xf32> to vector<8x512xbf16>
    %c0_6 = arith.constant 0 : index
    %c0_7 = arith.constant 0 : index
    %10 = vector.load %arg4[%c0_6, %c0_7] : memref<512x512xbf16, #tpu.memory_space<vmem>>, vector<512x512xbf16>
    %cst_8 = arith.constant dense<0.000000e+00> : vector<8x512xf32>
    %11 = tpu.matmul %9, %10, %cst_8 {dimension_numbers = #tpu.dot_dimension_numbers<[1], [0], [0], [1], [0, 0, 1, 1], [], []>} : vector<8x512xbf16>, vector<512x512xbf16>, vector<8x512xf32> -> vector<8x512xf32>
    %c0_9 = arith.constant 0 : index
    %c0_10 = arith.constant 0 : index
    %12 = vector.load %arg5[%c0_9, %c0_10] : memref<1x512xf32, #tpu.memory_space<vmem>>, vector<1x512xf32>
    %13 = vector.broadcast %12 : vector<1x512xf32> to vector<8x512xf32>
    %14 = arith.addf %11, %13 : vector<8x512xf32>
    %cst_11 = arith.constant 0.000000e+00 : f32
    %15 = vector.broadcast %cst_11 : f32 to vector<8x512xf32>
    %16 = arith.maximumf %14, %15 : vector<8x512xf32>
    %17 = arith.truncf %16 : vector<8x512xf32> to vector<8x512xbf16>
    %c0_12 = arith.constant 0 : index
    %c0_13 = arith.constant 0 : index
    %18 = vector.load %arg6[%c0_12, %c0_13] : memref<512x128xbf16, #tpu.memory_space<vmem>>, vector<512x128xbf16>
    %cst_14 = arith.constant dense<0.000000e+00> : vector<8x128xf32>
    %19 = tpu.matmul %17, %18, %cst_14 {dimension_numbers = #tpu.dot_dimension_numbers<[1], [0], [0], [1], [0, 0, 1, 1], [], []>} : vector<8x512xbf16>, vector<512x128xbf16>, vector<8x128xf32> -> vector<8x128xf32>
    %c0_15 = arith.constant 0 : index
    %c0_16 = arith.constant 0 : index
    %20 = vector.load %arg7[%c0_15, %c0_16] : memref<1x128xf32, #tpu.memory_space<vmem>>, vector<1x128xf32>
    %21 = vector.broadcast %20 : vector<1x128xf32> to vector<8x128xf32>
    %22 = arith.addf %19, %21 : vector<8x128xf32>
    %c0_17 = arith.constant 0 : index
    %c0_18 = arith.constant 0 : index
    %23 = vector.load %arg8[%c0_17, %c0_18] : memref<8x128xf32, #tpu.memory_space<vmem>>, vector<8x128xf32>
    tpu.vector_store %arg8[%c0_17, %c0_18], %22 {strides = array<i32>} : memref<8x128xf32, #tpu.memory_space<vmem>>, vector<8x128xf32>,
    return
  }
  func.func @transform_0(%arg0: i32) -> (i32, i32) {
    %c0_i32 = arith.constant 0 : i32
    %c0_i32_0 = arith.constant 0 : i32
    return %arg0, %c0_i32 : i32, i32
  }
  func.func @transform_1(%arg0: i32) -> (i32, i32) {
    %c0_i32 = arith.constant 0 : i32
    %c0_i32_0 = arith.constant 0 : i32
    %c0_i32_1 = arith.constant 0 : i32
    return %c0_i32, %c0_i32_0 : i32, i32
  }
  func.func @transform_2(%arg0: i32) -> (i32, i32) {
    %c0_i32 = arith.constant 0 : i32
    %c0_i32_0 = arith.constant 0 : i32
    %c0_i32_1 = arith.constant 0 : i32
    return %c0_i32, %c0_i32_0 : i32, i32
  }
  func.func @transform_3(%arg0: i32) -> (i32, i32) {
    %c0_i32 = arith.constant 0 : i32
    %c0_i32_0 = arith.constant 0 : i32
    %c0_i32_1 = arith.constant 0 : i32
    return %c0_i32, %c0_i32_0 : i32, i32
  }
  func.func @transform_4(%arg0: i32) -> (i32, i32) {
    %c0_i32 = arith.constant 0 : i32
    %c0_i32_0 = arith.constant 0 : i32
    %c0_i32_1 = arith.constant 0 : i32
    return %c0_i32, %c0_i32_0 : i32, i32
  }
  func.func @transform_5(%arg0: i32) -> (i32, i32) {
    %c0_i32 = arith.constant 0 : i32
    %c0_i32_0 = arith.constant 0 : i32
    %c0_i32_1 = arith.constant 0 : i32
    return %c0_i32, %c0_i32_0 : i32, i32
  }
  func.func @transform_6(%arg0: i32) -> (i32, i32) {
    %c0_i32 = arith.constant 0 : i32
    %c0_i32_0 = arith.constant 0 : i32
    %c0_i32_1 = arith.constant 0 : i32
    return %c0_i32, %c0_i32_0 : i32, i32
  }
  func.func @transform_7(%arg0: i32) -> (i32, i32) {
    %c0_i32 = arith.constant 0 : i32
    %c0_i32_0 = arith.constant 0 : i32
    return %arg0, %c0_i32 : i32, i32
  }
}

</mosaic_0001>

<llo_original>
// kernel: tpu_custom_call.1
$region0: #{tpu_custom_call.1}
  #allocation0 [shape = 'u32[]', space=smem, size = 0x4, offset = 0x4, fixed_abs, tag = 'smem constant byte address 0x4 - core index']
  #allocation1 [shape = 'u32[144,128]{1,0:T(1,128)}', space=vmem, size = 0x12000, scoped, tag = 'internal scratch']
  %s0 = inlined_call_operand.hbm [shape: f32[8,768], index: 0, kind: input, shape index: {}]
  %s1 = inlined_call_operand.hbm [shape: bf16[768,512], index: 1, kind: input, shape index: {}]
  %s2 = inlined_call_operand.hbm [shape: f32[1,512], index: 2, kind: input, shape index: {}]
  %s3 = inlined_call_operand.hbm [shape: bf16[512,512], index: 3, kind: input, shape index: {}]
  %s4 = inlined_call_operand.vmem [shape: f32[1,512], index: 4, kind: input, shape index: {}]
  %s5 = inlined_call_operand.hbm [shape: bf16[512,128], index: 5, kind: input, shape index: {}]
  %s6 = inlined_call_operand.vmem [shape: f32[1,128], index: 6, kind: input, shape index: {}]
  %s7 = inlined_call_operand.hbm [shape: f32[8,128], index: 7, kind: output, shape index: {}]
  %s8 = sld [smem:[#allocation0]]
  $region58: #{tpu_custom_call.1} parent=0
    _
  %s10 = ssub.s32 1, %s8
  %s11 = scalar_select 0, %s10, %s8
  $region1: #{tpu_custom_call.1} parent=0
    #allocation2 [shape = 'u8[24576]{0}', space=vmem, size = 0x6000, scoped, tag = 'input window, operand 0, single buffered']
    #allocation3 [shape = 's32[1]{0}', space=sflag, size = 0x4, scoped, tag = 'scoped memory for tpu_custom_call.1']
    #allocation4 [shape = 's32[1]{0}', space=sflag, size = 0x4, scoped, tag = 'scoped memory for tpu_custom_call.1']
    #allocation5 [shape = 'u8[786432]{0}', space=vmem, size = 0xc0000, scoped, tag = 'input window, operand 1, single buffered']
    #allocation6 [shape = 's32[1]{0}', space=sflag, size = 0x4, scoped, tag = 'scoped memory for tpu_custom_call.1']
    #allocation7 [shape = 'u8[2048]{0}', space=vmem, size = 0x800, scoped, tag = 'input window, operand 2, single buffered']
    #allocation8 [shape = 'u8[524288]{0}', space=vmem, size = 0x80000, scoped, tag = 'input window, operand 3, single buffered']
    #allocation9 [shape = 's32[1]{0}', space=sflag, size = 0x4, scoped, tag = 'scoped memory for tpu_custom_call.1']
    #allocation10 [shape = 'u8[131072]{0}', space=vmem, size = 0x20000, scoped, tag = 'input window, operand 5, single buffered']
    #allocation11 [shape = 'u8[4096]{0}', space=vmem, size = 0x1000, scoped, tag = 'output window, operand 0, single buffered']
    %12 = vsyncpa [#allocation3], 0
    %13 = vsyncpa [#allocation6], 0
    %14 = vsyncpa [#allocation9], 0
    %15 = vsyncpa [#allocation4], 0
    // Predicated region
    $region2: #{tpu_custom_call.1} parent=1 // pred_check
      _
    $region3: #{tpu_custom_call.1} parent=1 // pred_check_branch
      %17 = sbr.rel (0) target = $region5
    $region4: #{tpu_custom_call.1} parent=1 // pred_region
      %s19 = ssub.s32 768, 768
      %20 = vsyncadd [#allocation3], %s19
      %s22 = sshll.u32 [#allocation2], 4
      %s23 = int_to_ptr.vmem [resolvable:$true] %s22
      %25 = dma.hbm_to_vmem [thread:$0]  %s0, 768, %s23, [#allocation3]
    $region5: #{tpu_custom_call.1} parent=1 // pred_fallthru
      _
    // Predicated region
    $region6: #{tpu_custom_call.1} parent=1 // pred_check
      _
    $region7: #{tpu_custom_call.1} parent=1 // pred_check_branch
      %27 = sbr.rel (0) target = $region9
    $region8: #{tpu_custom_call.1} parent=1 // pred_region
      %s29 = ssub.s32 24576, 24576
      %30 = vsyncadd [#allocation6], %s29
      %s31 = sshll.u32 [#allocation5], 4
      %s32 = int_to_ptr.vmem [resolvable:$true] %s31
      %37 = dma.hbm_to_vmem [thread:$0]  %s1, 24576, %s32, [#allocation6], 256, 256, 16
    $region9: #{tpu_custom_call.1} parent=1 // pred_fallthru
      _
    // Predicated region
    $region10: #{tpu_custom_call.1} parent=1 // pred_check
      _
    $region11: #{tpu_custom_call.1} parent=1 // pred_check_branch
      %39 = sbr.rel (0) target = $region13
    $region12: #{tpu_custom_call.1} parent=1 // pred_region
      %s41 = ssub.s32 64, 64
      %42 = vsyncadd [#allocation6], %s41
      %s44 = sshll.u32 [#allocation7], 4
      %s45 = int_to_ptr.vmem [resolvable:$true] %s44
      %47 = dma.hbm_to_vmem [thread:$0]  %s2, 64, %s45, [#allocation6]
    $region13: #{tpu_custom_call.1} parent=1 // pred_fallthru
      _
    // Predicated region
    $region14: #{tpu_custom_call.1} parent=1 // pred_check
      _
    $region15: #{tpu_custom_call.1} parent=1 // pred_check_branch
      %49 = sbr.rel (0) target = $region17
    $region16: #{tpu_custom_call.1} parent=1 // pred_region
      %s51 = ssub.s32 16384, 16384
      %52 = vsyncadd [#allocation9], %s51
      %s53 = sshll.u32 [#allocation8], 4
      %s54 = int_to_ptr.vmem [resolvable:$true] %s53
      %59 = dma.hbm_to_vmem [thread:$0]  %s3, 16384, %s54, [#allocation9], 256, 256, 16
    $region17: #{tpu_custom_call.1} parent=1 // pred_fallthru
      _
    // Predicated region
    $region18: #{tpu_custom_call.1} parent=1 // pred_check
      _
    $region19: #{tpu_custom_call.1} parent=1 // pred_check_branch
      %61 = sbr.rel (0) target = $region21
    $region20: #{tpu_custom_call.1} parent=1 // pred_region
      _
    $region21: #{tpu_custom_call.1} parent=1 // pred_fallthru
      _
    // Predicated region
    $region22: #{tpu_custom_call.1} parent=1 // pred_check
      _
    $region23: #{tpu_custom_call.1} parent=1 // pred_check_branch
      %63 = sbr.rel (0) target = $region25
    $region24: #{tpu_custom_call.1} parent=1 // pred_region
      %s65 = ssub.s32 4096, 4096
      %66 = vsyncadd [#allocation9], %s65
      %s67 = sshll.u32 [#allocation10], 4
      %s68 = int_to_ptr.vmem [resolvable:$true] %s67
      %73 = dma.hbm_to_vmem [thread:$0]  %s5, 4096, %s68, [#allocation9], 64, 64, 4
    $region25: #{tpu_custom_call.1} parent=1 // pred_fallthru
      _
    // Predicated region
    $region26: #{tpu_custom_call.1} parent=1 // pred_check
      _
    $region27: #{tpu_custom_call.1} parent=1 // pred_check_branch
      %75 = sbr.rel (0) target = $region29
    $region28: #{tpu_custom_call.1} parent=1 // pred_region
      _
    $region29: #{tpu_custom_call.1} parent=1 // pred_fallthru
      _
    // Predicated region
    $region30: #{tpu_custom_call.1} parent=1 // pred_check
      _
    $region31: #{tpu_custom_call.1} parent=1 // pred_check_branch
      %77 = sbr.rel (0) target = $region33
    $region32: #{tpu_custom_call.1} parent=1 // pred_region
      %78 = dma.done [#allocation3], 768
    $region33: #{tpu_custom_call.1} parent=1 // pred_fallthru
      _
    // Predicated region
    $region34: #{tpu_custom_call.1} parent=1 // pred_check
      _
    $region35: #{tpu_custom_call.1} parent=1 // pred_check_branch
      %80 = sbr.rel (0) target = $region37
    $region36: #{tpu_custom_call.1} parent=1 // pred_region
      %81 = dma.done [#allocation6], 24576
    $region37: #{tpu_custom_call.1} parent=1 // pred_fallthru
      _
    // Predicated region
    $region38: #{tpu_custom_call.1} parent=1 // pred_check
      _
    $region39: #{tpu_custom_call.1} parent=1 // pred_check_branch
      %83 = sbr.rel (0) target = $region41
    $region40: #{tpu_custom_call.1} parent=1 // pred_region
      %84 = dma.done [#allocation6], 64
    $region41: #{tpu_custom_call.1} parent=1 // pred_fallthru
      _
    // Predicated region
    $region42: #{tpu_custom_call.1} parent=1 // pred_check
      _
    $region43: #{tpu_custom_call.1} parent=1 // pred_check_branch
      %86 = sbr.rel (0) target = $region45
    $region44: #{tpu_custom_call.1} parent=1 // pred_region
      %87 = dma.done [#allocation9], 16384
    $region45: #{tpu_custom_call.1} parent=1 // pred_fallthru
      _
    // Predicated region
    $region46: #{tpu_custom_call.1} parent=1 // pred_check
      _
    $region47: #{tpu_custom_call.1} parent=1 // pred_check_branch
      %89 = sbr.rel (0) target = $region49
    $region48: #{tpu_custom_call.1} parent=1 // pred_region
      %90 = dma.done [#allocation9], 4096
    $region49: #{tpu_custom_call.1} parent=1 // pred_fallthru
      _
    %v92 = vld [vmem:[#allocation2] sm:$0xff]
    %v93 = vld [vmem:[#allocation2 + $0x8] sm:$0xff]
    %v94 = vld [vmem:[#allocation2 + $0x10] sm:$0xff]
    %v95 = vld [vmem:[#allocation2 + $0x18] sm:$0xff]
    %v96 = vld [vmem:[#allocation2 + $0x20] sm:$0xff]
    %v97 = vld [vmem:[#allocation2 + $0x28] sm:$0xff]
    %v98 = vpack.c.bf16 %v92, %v92
    %v99 = vpack.c.bf16 %v93, %v93
    %v100 = vpack.c.bf16 %v94, %v94
    %v101 = vpack.c.bf16 %v95, %v95
    %v102 = vpack.c.bf16 %v96, %v96
    %v103 = vpack.c.bf16 %v97, %v97
    %v104 = vld [vmem:[#allocation5] sm:$0xff]
    %v105 = vld [vmem:[#allocation5 + $0x8] sm:$0xff]
    %v106 = vld [vmem:[#allocation5 + $0x10] sm:$0xff]
    %v107 = vld [vmem:[#allocation5 + $0x18] sm:$0xff]
    %v108 = vld [vmem:[#allocation5 + $0x20] sm:$0xff]
    %v109 = vld [vmem:[#allocation5 + $0x28] sm:$0xff]
    %v110 = vld [vmem:[#allocation5 + $0x30] sm:$0xff]
    %v111 = vld [vmem:[#allocation5 + $0x38] sm:$0xff]
    %v112 = vld [vmem:[#allocation5 + $0x40] sm:$0xff]
    %v113 = vld [vmem:[#allocation5 + $0x48] sm:$0xff]
    %v114 = vld [vmem:[#allocation5 + $0x50] sm:$0xff]
    %v115 = vld [vmem:[#allocation5 + $0x58] sm:$0xff]
    %v116 = vld [vmem:[#allocation5 + $0x60] sm:$0xff]
    %v117 = vld [vmem:[#allocation5 + $0x68] sm:$0xff]
    %v118 = vld [vmem:[#allocation5 + $0x70] sm:$0xff]
    %v119 = vld [vmem:[#allocation5 + $0x78] sm:$0xff]
    %v120 = vld [vmem:[#allocation5 + $0x80] sm:$0xff]
    %v121 = vld [vmem:[#allocation5 + $0x88] sm:$0xff]
    %v122 = vld [vmem:[#allocation5 + $0x90] sm:$0xff]
    %v123 = vld [vmem:[#allocation5 + $0x98] sm:$0xff]
    %v124 = vld [vmem:[#allocation5 + $0xa0] sm:$0xff]
    %v125 = vld [vmem:[#allocation5 + $0xa8] sm:$0xff]
    %v126 = vld [vmem:[#allocation5 + $0xb0] sm:$0xff]
    %v127 = vld [vmem:[#allocation5 + $0xb8] sm:$0xff]
    %v128 = vld [vmem:[#allocation5 + $0xc0] sm:$0xff]
    %v129 = vld [vmem:[#allocation5 + $0xc8] sm:$0xff]
    %v130 = vld [vmem:[#allocation5 + $0xd0] sm:$0xff]
    %v131 = vld [vmem:[#allocation5 + $0xd8] sm:$0xff]
    %v132 = vld [vmem:[#allocation5 + $0xe0] sm:$0xff]
    %v133 = vld [vmem:[#allocation5 + $0xe8] sm:$0xff]
    %v134 = vld [vmem:[#allocation5 + $0xf0] sm:$0xff]
    %v135 = vld [vmem:[#allocation5 + $0xf8] sm:$0xff]
    %v136 = vld [vmem:[#allocation5 + $0x100] sm:$0xff]
    %v137 = vld [vmem:[#allocation5 + $0x108] sm:$0xff]
    %v138 = vld [vmem:[#allocation5 + $0x110] sm:$0xff]
    %v139 = vld [vmem:[#allocation5 + $0x118] sm:$0xff]
    %v140 = vld [vmem:[#allocation5 + $0x120] sm:$0xff]
    %v141 = vld [vmem:[#allocation5 + $0x128] sm:$0xff]
    %v142 = vld [vmem:[#allocation5 + $0x130] sm:$0xff]
    %v143 = vld [vmem:[#allocation5 + $0x138] sm:$0xff]
    %v144 = vld [vmem:[#allocation5 + $0x140] sm:$0xff]
    %v145 = vld [vmem:[#allocation5 + $0x148] sm:$0xff]
    %v146 = vld [vmem:[#allocation5 + $0x150] sm:$0xff]
    %v147 = vld [vmem:[#allocation5 + $0x158] sm:$0xff]
    %v148 = vld [vmem:[#allocation5 + $0x160] sm:$0xff]
    %v149 = vld [vmem:[#allocation5 + $0x168] sm:$0xff]
    %v150 = vld [vmem:[#allocation5 + $0x170] sm:$0xff]
    %v151 = vld [vmem:[#allocation5 + $0x178] sm:$0xff]
    %v152 = vld [vmem:[#allocation5 + $0x180] sm:$0xff]
    %v153 = vld [vmem:[#allocation5 + $0x188] sm:$0xff]
    %v154 = vld [vmem:[#allocation5 + $0x190] sm:$0xff]
    %v155 = vld [vmem:[#allocation5 + $0x198] sm:$0xff]
    %v156 = vld [vmem:[#allocation5 + $0x1a0] sm:$0xff]
    %v157 = vld [vmem:[#allocation5 + $0x1a8] sm:$0xff]
    %v158 = vld [vmem:[#allocation5 + $0x1b0] sm:$0xff]
    %v159 = vld [vmem:[#allocation5 + $0x1b8] sm:$0xff]
    %v160 = vld [vmem:[#allocation5 + $0x1c0] sm:$0xff]
    %v161 = vld [vmem:[#allocation5 + $0x1c8] sm:$0xff]
    %v162 = vld [vmem:[#allocation5 + $0x1d0] sm:$0xff]
    %v163 = vld [vmem:[#allocation5 + $0x1d8] sm:$0xff]
    %v164 = vld [vmem:[#allocation5 + $0x1e0] sm:$0xff]
    %v165 = vld [vmem:[#allocation5 + $0x1e8] sm:$0xff]
    %v166 = vld [vmem:[#allocation5 + $0x1f0] sm:$0xff]
    %v167 = vld [vmem:[#allocation5 + $0x1f8] sm:$0xff]
    %v168 = vld [vmem:[#allocation5 + $0x200] sm:$0xff]
    %v169 = vld [vmem:[#allocation5 + $0x208] sm:$0xff]
    %v170 = vld [vmem:[#allocation5 + $0x210] sm:$0xff]
    %v171 = vld [vmem:[#allocation5 + $0x218] sm:$0xff]
    %v172 = vld [vmem:[#allocation5 + $0x220] sm:$0xff]
    %v173 = vld [vmem:[#allocation5 + $0x228] sm:$0xff]
    %v174 = vld [vmem:[#allocation5 + $0x230] sm:$0xff]
    %v175 = vld [vmem:[#allocation5 + $0x238] sm:$0xff]
    %v176 = vld [vmem:[#allocation5 + $0x240] sm:$0xff]
    %v177 = vld [vmem:[#allocation5 + $0x248] sm:$0xff]
    %v178 = vld [vmem:[#allocation5 + $0x250] sm:$0xff]
    %v179 = vld [vmem:[#allocation5 + $0x258] sm:$0xff]
    %v180 = vld [vmem:[#allocation5 + $0x260] sm:$0xff]
    %v181 = vld [vmem:[#allocation5 + $0x268] sm:$0xff]
    %v182 = vld [vmem:[#allocation5 + $0x270] sm:$0xff]
    %v183 = vld [vmem:[#allocation5 + $0x278] sm:$0xff]
    %v184 = vld [vmem:[#allocation5 + $0x280] sm:$0xff]
    %v185 = vld [vmem:[#allocation5 + $0x288] sm:$0xff]
    %v186 = vld [vmem:[#allocation5 + $0x290] sm:$0xff]
    %v187 = vld [vmem:[#allocation5 + $0x298] sm:$0xff]
    %v188 = vld [vmem:[#allocation5 + $0x2a0] sm:$0xff]
    %v189 = vld [vmem:[#allocation5 + $0x2a8] sm:$0xff]
    %v190 = vld [vmem:[#allocation5 + $0x2b0] sm:$0xff]
    %v191 = vld [vmem:[#allocation5 + $0x2b8] sm:$0xff]
    %v192 = vld [vmem:[#allocation5 + $0x2c0] sm:$0xff]
    %v193 = vld [vmem:[#allocation5 + $0x2c8] sm:$0xff]
    %v194 = vld [vmem:[#allocation5 + $0x2d0] sm:$0xff]
    %v195 = vld [vmem:[#allocation5 + $0x2d8] sm:$0xff]
    %v196 = vld [vmem:[#allocation5 + $0x2e0] sm:$0xff]
    %v197 = vld [vmem:[#allocation5 + $0x2e8] sm:$0xff]
    %v198 = vld [vmem:[#allocation5 + $0x2f0] sm:$0xff]
    %v199 = vld [vmem:[#allocation5 + $0x2f8] sm:$0xff]
    %v200 = vld [vmem:[#allocation5 + $0x300] sm:$0xff]
    %v201 = vld [vmem:[#allocation5 + $0x308] sm:$0xff]
    %v202 = vld [vmem:[#allocation5 + $0x310] sm:$0xff]
    %v203 = vld [vmem:[#allocation5 + $0x318] sm:$0xff]
    %v204 = vld [vmem:[#allocation5 + $0x320] sm:$0xff]
    %v205 = vld [vmem:[#allocation5 + $0x328] sm:$0xff]
    %v206 = vld [vmem:[#allocation5 + $0x330] sm:$0xff]
    %v207 = vld [vmem:[#allocation5 + $0x338] sm:$0xff]
    %v208 = vld [vmem:[#allocation5 + $0x340] sm:$0xff]
    %v209 = vld [vmem:[#allocation5 + $0x348] sm:$0xff]
    %v210 = vld [vmem:[#allocation5 + $0x350] sm:$0xff]
    %v211 = vld [vmem:[#allocation5 + $0x358] sm:$0xff]
    %v212 = vld [vmem:[#allocation5 + $0x360] sm:$0xff]
    %v213 = vld [vmem:[#allocation5 + $0x368] sm:$0xff]
    %v214 = vld [vmem:[#allocation5 + $0x370] sm:$0xff]
    %v215 = vld [vmem:[#allocation5 + $0x378] sm:$0xff]
    %v216 = vld [vmem:[#allocation5 + $0x380] sm:$0xff]
    %v217 = vld [vmem:[#allocation5 + $0x388] sm:$0xff]
    %v218 = vld [vmem:[#allocation5 + $0x390] sm:$0xff]
    %v219 = vld [vmem:[#allocation5 + $0x398] sm:$0xff]
    %v220 = vld [vmem:[#allocation5 + $0x3a0] sm:$0xff]
    %v221 = vld [vmem:[#allocation5 + $0x3a8] sm:$0xff]
    %v222 = vld [vmem:[#allocation5 + $0x3b0] sm:$0xff]
    %v223 = vld [vmem:[#allocation5 + $0x3b8] sm:$0xff]
    %v224 = vld [vmem:[#allocation5 + $0x3c0] sm:$0xff]
    %v225 = vld [vmem:[#allocation5 + $0x3c8] sm:$0xff]
    %v226 = vld [vmem:[#allocation5 + $0x3d0] sm:$0xff]
    %v227 = vld [vmem:[#allocation5 + $0x3d8] sm:$0xff]
    %v228 = vld [vmem:[#allocation5 + $0x3e0] sm:$0xff]
    %v229 = vld [vmem:[#allocation5 + $0x3e8] sm:$0xff]
    %v230 = vld [vmem:[#allocation5 + $0x3f0] sm:$0xff]
    %v231 = vld [vmem:[#allocation5 + $0x3f8] sm:$0xff]
    %v232 = vld [vmem:[#allocation5 + $0x400] sm:$0xff]
    %v233 = vld [vmem:[#allocation5 + $0x408] sm:$0xff]
    %v234 = vld [vmem:[#allocation5 + $0x410] sm:$0xff]
    %v235 = vld [vmem:[#allocation5 + $0x418] sm:$0xff]
    %v236 = vld [vmem:[#allocation5 + $0x420] sm:$0xff]
    %v237 = vld [vmem:[#allocation5 + $0x428] sm:$0xff]
    %v238 = vld [vmem:[#allocation5 + $0x430] sm:$0xff]
    %v239 = vld [vmem:[#allocation5 + $0x438] sm:$0xff]
    %v240 = vld [vmem:[#allocation5 + $0x440] sm:$0xff]
    %v241 = vld [vmem:[#allocation5 + $0x448] sm:$0xff]
    %v242 = vld [vmem:[#allocation5 + $0x450] sm:$0xff]
    %v243 = vld [vmem:[#allocation5 + $0x458] sm:$0xff]
    %v244 = vld [vmem:[#allocation5 + $0x460] sm:$0xff]
    %v245 = vld [vmem:[#allocation5 + $0x468] sm:$0xff]
    %v246 = vld [vmem:[#allocation5 + $0x470] sm:$0xff]
    %v247 = vld [vmem:[#allocation5 + $0x478] sm:$0xff]
    %v248 = vld [vmem:[#allocation5 + $0x480] sm:$0xff]
    %v249 = vld [vmem:[#allocation5 + $0x488] sm:$0xff]
    %v250 = vld [vmem:[#allocation5 + $0x490] sm:$0xff]
    %v251 = vld [vmem:[#allocation5 + $0x498] sm:$0xff]
    %v252 = vld [vmem:[#allocation5 + $0x4a0] sm:$0xff]
    %v253 = vld [vmem:[#allocation5 + $0x4a8] sm:$0xff]
    %v254 = vld [vmem:[#allocation5 + $0x4b0] sm:$0xff]
    %v255 = vld [vmem:[#allocation5 + $0x4b8] sm:$0xff]
    %v256 = vld [vmem:[#allocation5 + $0x4c0] sm:$0xff]
    %v257 = vld [vmem:[#allocation5 + $0x4c8] sm:$0xff]
    %v258 = vld [vmem:[#allocation5 + $0x4d0] sm:$0xff]
    %v259 = vld [vmem:[#allocation5 + $0x4d8] sm:$0xff]
    %v260 = vld [vmem:[#allocation5 + $0x4e0] sm:$0xff]
    %v261 = vld [vmem:[#allocation5 + $0x4e8] sm:$0xff]
    %v262 = vld [vmem:[#allocation5 + $0x4f0] sm:$0xff]
    %v263 = vld [vmem:[#allocation5 + $0x4f8] sm:$0xff]
    %v264 = vld [vmem:[#allocation5 + $0x500] sm:$0xff]
    %v265 = vld [vmem:[#allocation5 + $0x508] sm:$0xff]
    %v266 = vld [vmem:[#allocation5 + $0x510] sm:$0xff]
    %v267 = vld [vmem:[#allocation5 + $0x518] sm:$0xff]
    %v268 = vld [vmem:[#allocation5 + $0x520] sm:$0xff]
    %v269 = vld [vmem:[#allocation5 + $0x528] sm:$0xff]
    %v270 = vld [vmem:[#allocation5 + $0x530] sm:$0xff]
    %v271 = vld [vmem:[#allocation5 + $0x538] sm:$0xff]
    %v272 = vld [vmem:[#allocation5 + $0x540] sm:$0xff]
    %v273 = vld [vmem:[#allocation5 + $0x548] sm:$0xff]
    %v274 = vld [vmem:[#allocation5 + $0x550] sm:$0xff]
    %v275 = vld [vmem:[#allocation5 + $0x558] sm:$0xff]
    %v276 = vld [vmem:[#allocation5 + $0x560] sm:$0xff]
    %v277 = vld [vmem:[#allocation5 + $0x568] sm:$0xff]
    %v278 = vld [vmem:[#allocation5 + $0x570] sm:$0xff]
    %v279 = vld [vmem:[#allocation5 + $0x578] sm:$0xff]
    %v280 = vld [vmem:[#allocation5 + $0x580] sm:$0xff]
    %v281 = vld [vmem:[#allocation5 + $0x588] sm:$0xff]
    %v282 = vld [vmem:[#allocation5 + $0x590] sm:$0xff]
    %v283 = vld [vmem:[#allocation5 + $0x598] sm:$0xff]
    %v284 = vld [vmem:[#allocation5 + $0x5a0] sm:$0xff]
    %v285 = vld [vmem:[#allocation5 + $0x5a8] sm:$0xff]
    %v286 = vld [vmem:[#allocation5 + $0x5b0] sm:$0xff]
    %v287 = vld [vmem:[#allocation5 + $0x5b8] sm:$0xff]
    %v288 = vld [vmem:[#allocation5 + $0x5c0] sm:$0xff]
    %v289 = vld [vmem:[#allocation5 + $0x5c8] sm:$0xff]
    %v290 = vld [vmem:[#allocation5 + $0x5d0] sm:$0xff]
    %v291 = vld [vmem:[#allocation5 + $0x5d8] sm:$0xff]
    %v292 = vld [vmem:[#allocation5 + $0x5e0] sm:$0xff]
    %v293 = vld [vmem:[#allocation5 + $0x5e8] sm:$0xff]
    %v294 = vld [vmem:[#allocation5 + $0x5f0] sm:$0xff]
    %v295 = vld [vmem:[#allocation5 + $0x5f8] sm:$0xff]
    %v296 = vld [vmem:[#allocation7] sm:$0xf]
    %v298 = vlaneseq
    %v299 = vshrl.u32 %v298, 7
    %v300 = vsub.s32 0, %v299
    %v301 = vrot.slane %v296, %v300
    %v302 = vlaneseq
    %v303 = vshrl.u32 %v302, 7
    %v304 = vsub.s32 1, %v303
    %v305 = vrot.slane %v296, %v304
    %v306 = vlaneseq
    %v307 = vshrl.u32 %v306, 7
    %v308 = vsub.s32 2, %v307
    %v309 = vrot.slane %v296, %v308
    %v310 = vlaneseq
    %v311 = vshrl.u32 %v310, 7
    %v312 = vsub.s32 3, %v311
    %v313 = vrot.slane %v296, %v312
    %v510 = vunpack.c.l.b16 %v104
    %v511 = vunpack.c.h.b16 %v104
    %v512 = vunpack.c.l.b16 %v105
    %v513 = vunpack.c.h.b16 %v105
    %v514 = vunpack.c.l.b16 %v106
    %v515 = vunpack.c.h.b16 %v106
    %v516 = vunpack.c.l.b16 %v107
    %v517 = vunpack.c.h.b16 %v107
    %v518 = vunpack.c.l.b16 %v108
    %v519 = vunpack.c.h.b16 %v108
    %v520 = vunpack.c.l.b16 %v109
    %v521 = vunpack.c.h.b16 %v109
    %v522 = vunpack.c.l.b16 %v110
    %v523 = vunpack.c.h.b16 %v110
    %v524 = vunpack.c.l.b16 %v111
    %v525 = vunpack.c.h.b16 %v111
    %v526 = vunpack.c.l.b16 %v112
    %v527 = vunpack.c.h.b16 %v112
    %v528 = vunpack.c.l.b16 %v113
    %v529 = vunpack.c.h.b16 %v113
    %v530 = vunpack.c.l.b16 %v114
    %v531 = vunpack.c.h.b16 %v114
    %v532 = vunpack.c.l.b16 %v115
    %v533 = vunpack.c.h.b16 %v115
    %v534 = vunpack.c.l.b16 %v116
    %v535 = vunpack.c.h.b16 %v116
    %v536 = vunpack.c.l.b16 %v117
    %v537 = vunpack.c.h.b16 %v117
    %v538 = vunpack.c.l.b16 %v118
    %v539 = vunpack.c.h.b16 %v118
    %v540 = vunpack.c.l.b16 %v119
    %v541 = vunpack.c.h.b16 %v119
    %v542 = vunpack.c.l.b16 %v120
    %v543 = vunpack.c.h.b16 %v120
    %v544 = vunpack.c.l.b16 %v121
    %v545 = vunpack.c.h.b16 %v121
    %v546 = vunpack.c.l.b16 %v122
    %v547 = vunpack.c.h.b16 %v122
    %v548 = vunpack.c.l.b16 %v123
    %v549 = vunpack.c.h.b16 %v123
    %v550 = vunpack.c.l.b16 %v124
    %v551 = vunpack.c.h.b16 %v124
    %v552 = vunpack.c.l.b16 %v125
    %v553 = vunpack.c.h.b16 %v125
    %v554 = vunpack.c.l.b16 %v126
    %v555 = vunpack.c.h.b16 %v126
    %v556 = vunpack.c.l.b16 %v127
    %v557 = vunpack.c.h.b16 %v127
    %v558 = vunpack.c.l.b16 %v128
    %v559 = vunpack.c.h.b16 %v128
    %v560 = vunpack.c.l.b16 %v129
    %v561 = vunpack.c.h.b16 %v129
    %v562 = vunpack.c.l.b16 %v130
    %v563 = vunpack.c.h.b16 %v130
    %v564 = vunpack.c.l.b16 %v131
    %v565 = vunpack.c.h.b16 %v131
    %v566 = vunpack.c.l.b16 %v132
    %v567 = vunpack.c.h.b16 %v132
    %v568 = vunpack.c.l.b16 %v133
    %v569 = vunpack.c.h.b16 %v133
    %v570 = vunpack.c.l.b16 %v134
    %v571 = vunpack.c.h.b16 %v134
    %v572 = vunpack.c.l.b16 %v135
    %v573 = vunpack.c.h.b16 %v135
    %v574 = vunpack.c.l.b16 %v136
    %v575 = vunpack.c.h.b16 %v136
    %v576 = vunpack.c.l.b16 %v137
    %v577 = vunpack.c.h.b16 %v137
    %v578 = vunpack.c.l.b16 %v138
    %v579 = vunpack.c.h.b16 %v138
    %v580 = vunpack.c.l.b16 %v139
    %v581 = vunpack.c.h.b16 %v139
    %v582 = vunpack.c.l.b16 %v140
    %v583 = vunpack.c.h.b16 %v140
    %v584 = vunpack.c.l.b16 %v141
    %v585 = vunpack.c.h.b16 %v141
    %v586 = vunpack.c.l.b16 %v142
    %v587 = vunpack.c.h.b16 %v142
    %v588 = vunpack.c.l.b16 %v143
    %v589 = vunpack.c.h.b16 %v143
    %v590 = vunpack.c.l.b16 %v144
    %v591 = vunpack.c.h.b16 %v144
    %v592 = vunpack.c.l.b16 %v145
    %v593 = vunpack.c.h.b16 %v145
    %v594 = vunpack.c.l.b16 %v146
    %v595 = vunpack.c.h.b16 %v146
    %v596 = vunpack.c.l.b16 %v147
    %v597 = vunpack.c.h.b16 %v147
    %v598 = vunpack.c.l.b16 %v148
    %v599 = vunpack.c.h.b16 %v148
    %v600 = vunpack.c.l.b16 %v149
    %v601 = vunpack.c.h.b16 %v149
    %v602 = vunpack.c.l.b16 %v150
    %v603 = vunpack.c.h.b16 %v150
    %v604 = vunpack.c.l.b16 %v151
    %v605 = vunpack.c.h.b16 %v151
    %v606 = vunpack.c.l.b16 %v152
    %v607 = vunpack.c.h.b16 %v152
    %v608 = vunpack.c.l.b16 %v153
    %v609 = vunpack.c.h.b16 %v153
    %v610 = vunpack.c.l.b16 %v154
    %v611 = vunpack.c.h.b16 %v154
    %v612 = vunpack.c.l.b16 %v155
    %v613 = vunpack.c.h.b16 %v155
    %v614 = vunpack.c.l.b16 %v156
    %v615 = vunpack.c.h.b16 %v156
    %v616 = vunpack.c.l.b16 %v157
    %v617 = vunpack.c.h.b16 %v157
    %v618 = vunpack.c.l.b16 %v158
    %v619 = vunpack.c.h.b16 %v158
    %v620 = vunpack.c.l.b16 %v159
    %v621 = vunpack.c.h.b16 %v159
    %v622 = vunpack.c.l.b16 %v160
    %v623 = vunpack.c.h.b16 %v160
    %v624 = vunpack.c.l.b16 %v161
    %v625 = vunpack.c.h.b16 %v161
    %v626 = vunpack.c.l.b16 %v162
    %v627 = vunpack.c.h.b16 %v162
    %v628 = vunpack.c.l.b16 %v163
    %v629 = vunpack.c.h.b16 %v163
    %v630 = vunpack.c.l.b16 %v164
    %v631 = vunpack.c.h.b16 %v164
    %v632 = vunpack.c.l.b16 %v165
    %v633 = vunpack.c.h.b16 %v165
    %v634 = vunpack.c.l.b16 %v166
    %v635 = vunpack.c.h.b16 %v166
    %v636 = vunpack.c.l.b16 %v167
    %v637 = vunpack.c.h.b16 %v167
    %v638 = vunpack.c.l.b16 %v168
    %v639 = vunpack.c.h.b16 %v168
    %v640 = vunpack.c.l.b16 %v169
    %v641 = vunpack.c.h.b16 %v169
    %v642 = vunpack.c.l.b16 %v170
    %v643 = vunpack.c.h.b16 %v170
    %v644 = vunpack.c.l.b16 %v171
    %v645 = vunpack.c.h.b16 %v171
    %v646 = vunpack.c.l.b16 %v172
    %v647 = vunpack.c.h.b16 %v172
    %v648 = vunpack.c.l.b16 %v173
    %v649 = vunpack.c.h.b16 %v173
    %v650 = vunpack.c.l.b16 %v174
    %v651 = vunpack.c.h.b16 %v174
    %v652 = vunpack.c.l.b16 %v175
    %v653 = vunpack.c.h.b16 %v175
    %v654 = vunpack.c.l.b16 %v176
    %v655 = vunpack.c.h.b16 %v176
    %v656 = vunpack.c.l.b16 %v177
    %v657 = vunpack.c.h.b16 %v177
    %v658 = vunpack.c.l.b16 %v178
    %v659 = vunpack.c.h.b16 %v178
    %v660 = vunpack.c.l.b16 %v179
    %v661 = vunpack.c.h.b16 %v179
    %v662 = vunpack.c.l.b16 %v180
    %v663 = vunpack.c.h.b16 %v180
    %v664 = vunpack.c.l.b16 %v181
    %v665 = vunpack.c.h.b16 %v181
    %v666 = vunpack.c.l.b16 %v182
    %v667 = vunpack.c.h.b16 %v182
    %v668 = vunpack.c.l.b16 %v183
    %v669 = vunpack.c.h.b16 %v183
    %v670 = vunpack.c.l.b16 %v184
    %v671 = vunpack.c.h.b16 %v184
    %v672 = vunpack.c.l.b16 %v185
    %v673 = vunpack.c.h.b16 %v185
    %v674 = vunpack.c.l.b16 %v186
    %v675 = vunpack.c.h.b16 %v186
    %v676 = vunpack.c.l.b16 %v187
    %v677 = vunpack.c.h.b16 %v187
    %v678 = vunpack.c.l.b16 %v188
    %v679 = vunpack.c.h.b16 %v188
    %v680 = vunpack.c.l.b16 %v189
    %v681 = vunpack.c.h.b16 %v189
    %v682 = vunpack.c.l.b16 %v190
    %v683 = vunpack.c.h.b16 %v190
    %v684 = vunpack.c.l.b16 %v191
    %v685 = vunpack.c.h.b16 %v191
    %v686 = vunpack.c.l.b16 %v192
    %v687 = vunpack.c.h.b16 %v192
    %v688 = vunpack.c.l.b16 %v193
    %v689 = vunpack.c.h.b16 %v193
    %v690 = vunpack.c.l.b16 %v194
    %v691 = vunpack.c.h.b16 %v194
    %v692 = vunpack.c.l.b16 %v195
    %v693 = vunpack.c.h.b16 %v195
    %v694 = vunpack.c.l.b16 %v196
    %v695 = vunpack.c.h.b16 %v196
    %v696 = vunpack.c.l.b16 %v197
    %v697 = vunpack.c.h.b16 %v197
    %v698 = vunpack.c.l.b16 %v198
    %v699 = vunpack.c.h.b16 %v198
    %v700 = vunpack.c.l.b16 %v199
    %v701 = vunpack.c.h.b16 %v199
    %v702 = vunpack.c.l.b16 %v200
    %v703 = vunpack.c.h.b16 %v200
    %v704 = vunpack.c.l.b16 %v201
    %v705 = vunpack.c.h.b16 %v201
    %v706 = vunpack.c.l.b16 %v202
    %v707 = vunpack.c.h.b16 %v202
    %v708 = vunpack.c.l.b16 %v203
    %v709 = vunpack.c.h.b16 %v203
    %v710 = vunpack.c.l.b16 %v204
    %v711 = vunpack.c.h.b16 %v204
    %v712 = vunpack.c.l.b16 %v205
    %v713 = vunpack.c.h.b16 %v205
    %v714 = vunpack.c.l.b16 %v206
    %v715 = vunpack.c.h.b16 %v206
    %v716 = vunpack.c.l.b16 %v207
    %v717 = vunpack.c.h.b16 %v207
    %v718 = vunpack.c.l.b16 %v208
    %v719 = vunpack.c.h.b16 %v208
    %v720 = vunpack.c.l.b16 %v209
    %v721 = vunpack.c.h.b16 %v209
    %v722 = vunpack.c.l.b16 %v210
    %v723 = vunpack.c.h.b16 %v210
    %v724 = vunpack.c.l.b16 %v211
    %v725 = vunpack.c.h.b16 %v211
    %v726 = vunpack.c.l.b16 %v212
    %v727 = vunpack.c.h.b16 %v212
    %v728 = vunpack.c.l.b16 %v213
    %v729 = vunpack.c.h.b16 %v213
    %v730 = vunpack.c.l.b16 %v214
    %v731 = vunpack.c.h.b16 %v214
    %v732 = vunpack.c.l.b16 %v215
    %v733 = vunpack.c.h.b16 %v215
    %v734 = vunpack.c.l.b16 %v216
    %v735 = vunpack.c.h.b16 %v216
    %v736 = vunpack.c.l.b16 %v217
    %v737 = vunpack.c.h.b16 %v217
    %v738 = vunpack.c.l.b16 %v218
    %v739 = vunpack.c.h.b16 %v218
    %v740 = vunpack.c.l.b16 %v219
    %v741 = vunpack.c.h.b16 %v219
    %v742 = vunpack.c.l.b16 %v220
    %v743 = vunpack.c.h.b16 %v220
    %v744 = vunpack.c.l.b16 %v221
    %v745 = vunpack.c.h.b16 %v221
    %v746 = vunpack.c.l.b16 %v222
    %v747 = vunpack.c.h.b16 %v222
    %v748 = vunpack.c.l.b16 %v223
    %v749 = vunpack.c.h.b16 %v223
    %v750 = vunpack.c.l.b16 %v224
    %v751 = vunpack.c.h.b16 %v224
    %v752 = vunpack.c.l.b16 %v225
    %v753 = vunpack.c.h.b16 %v225
    %v754 = vunpack.c.l.b16 %v226
    %v755 = vunpack.c.h.b16 %v226
    %v756 = vunpack.c.l.b16 %v227
    %v757 = vunpack.c.h.b16 %v227
    %v758 = vunpack.c.l.b16 %v228
    %v759 = vunpack.c.h.b16 %v228
    %v760 = vunpack.c.l.b16 %v229
    %v761 = vunpack.c.h.b16 %v229
    %v762 = vunpack.c.l.b16 %v230
    %v763 = vunpack.c.h.b16 %v230
    %v764 = vunpack.c.l.b16 %v231
    %v765 = vunpack.c.h.b16 %v231
    %v766 = vunpack.c.l.b16 %v232
    %v767 = vunpack.c.h.b16 %v232
    %v768 = vunpack.c.l.b16 %v233
    %v769 = vunpack.c.h.b16 %v233
    %v770 = vunpack.c.l.b16 %v234
    %v771 = vunpack.c.h.b16 %v234
    %v772 = vunpack.c.l.b16 %v235
    %v773 = vunpack.c.h.b16 %v235
    %v774 = vunpack.c.l.b16 %v236
    %v775 = vunpack.c.h.b16 %v236
    %v776 = vunpack.c.l.b16 %v237
    %v777 = vunpack.c.h.b16 %v237
    %v778 = vunpack.c.l.b16 %v238
    %v779 = vunpack.c.h.b16 %v238
    %v780 = vunpack.c.l.b16 %v239
    %v781 = vunpack.c.h.b16 %v239
    %v782 = vunpack.c.l.b16 %v240
    %v783 = vunpack.c.h.b16 %v240
    %v784 = vunpack.c.l.b16 %v241
    %v785 = vunpack.c.h.b16 %v241
    %v786 = vunpack.c.l.b16 %v242
    %v787 = vunpack.c.h.b16 %v242
    %v788 = vunpack.c.l.b16 %v243
    %v789 = vunpack.c.h.b16 %v243
    %v790 = vunpack.c.l.b16 %v244
    %v791 = vunpack.c.h.b16 %v244
    %v792 = vunpack.c.l.b16 %v245
    %v793 = vunpack.c.h.b16 %v245
    %v794 = vunpack.c.l.b16 %v246
    %v795 = vunpack.c.h.b16 %v246
    %v796 = vunpack.c.l.b16 %v247
    %v797 = vunpack.c.h.b16 %v247
    %v798 = vunpack.c.l.b16 %v248
    %v799 = vunpack.c.h.b16 %v248
    %v800 = vunpack.c.l.b16 %v249
    %v801 = vunpack.c.h.b16 %v249
    %v802 = vunpack.c.l.b16 %v250
    %v803 = vunpack.c.h.b16 %v250
    %v804 = vunpack.c.l.b16 %v251
    %v805 = vunpack.c.h.b16 %v251
    %v806 = vunpack.c.l.b16 %v252
    %v807 = vunpack.c.h.b16 %v252
    %v808 = vunpack.c.l.b16 %v253
    %v809 = vunpack.c.h.b16 %v253
    %v810 = vunpack.c.l.b16 %v254
    %v811 = vunpack.c.h.b16 %v254
    %v812 = vunpack.c.l.b16 %v255
    %v813 = vunpack.c.h.b16 %v255
    %v814 = vunpack.c.l.b16 %v256
    %v815 = vunpack.c.h.b16 %v256
    %v816 = vunpack.c.l.b16 %v257
    %v817 = vunpack.c.h.b16 %v257
    %v818 = vunpack.c.l.b16 %v258
    %v819 = vunpack.c.h.b16 %v258
    %v820 = vunpack.c.l.b16 %v259
    %v821 = vunpack.c.h.b16 %v259
    %v822 = vunpack.c.l.b16 %v260
    %v823 = vunpack.c.h.b16 %v260
    %v824 = vunpack.c.l.b16 %v261
    %v825 = vunpack.c.h.b16 %v261
    %v826 = vunpack.c.l.b16 %v262
    %v827 = vunpack.c.h.b16 %v262
    %v828 = vunpack.c.l.b16 %v263
    %v829 = vunpack.c.h.b16 %v263
    %v830 = vunpack.c.l.b16 %v264
    %v831 = vunpack.c.h.b16 %v264
    %v832 = vunpack.c.l.b16 %v265
    %v833 = vunpack.c.h.b16 %v265
    %v834 = vunpack.c.l.b16 %v266
    %v835 = vunpack.c.h.b16 %v266
    %v836 = vunpack.c.l.b16 %v267
    %v837 = vunpack.c.h.b16 %v267
    %v838 = vunpack.c.l.b16 %v268
    %v839 = vunpack.c.h.b16 %v268
    %v840 = vunpack.c.l.b16 %v269
    %v841 = vunpack.c.h.b16 %v269
    %v842 = vunpack.c.l.b16 %v270
    %v843 = vunpack.c.h.b16 %v270
    %v844 = vunpack.c.l.b16 %v271
    %v845 = vunpack.c.h.b16 %v271
    %v846 = vunpack.c.l.b16 %v272
    %v847 = vunpack.c.h.b16 %v272
    %v848 = vunpack.c.l.b16 %v273
    %v849 = vunpack.c.h.b16 %v273
    %v850 = vunpack.c.l.b16 %v274
    %v851 = vunpack.c.h.b16 %v274
    %v852 = vunpack.c.l.b16 %v275
    %v853 = vunpack.c.h.b16 %v275
    %v854 = vunpack.c.l.b16 %v276
    %v855 = vunpack.c.h.b16 %v276
    %v856 = vunpack.c.l.b16 %v277
    %v857 = vunpack.c.h.b16 %v277
    %v858 = vunpack.c.l.b16 %v278
    %v859 = vunpack.c.h.b16 %v278
    %v860 = vunpack.c.l.b16 %v279
    %v861 = vunpack.c.h.b16 %v279
    %v862 = vunpack.c.l.b16 %v280
    %v863 = vunpack.c.h.b16 %v280
    %v864 = vunpack.c.l.b16 %v281
    %v865 = vunpack.c.h.b16 %v281
    %v866 = vunpack.c.l.b16 %v282
    %v867 = vunpack.c.h.b16 %v282
    %v868 = vunpack.c.l.b16 %v283
    %v869 = vunpack.c.h.b16 %v283
    %v870 = vunpack.c.l.b16 %v284
    %v871 = vunpack.c.h.b16 %v284
    %v872 = vunpack.c.l.b16 %v285
    %v873 = vunpack.c.h.b16 %v285
    %v874 = vunpack.c.l.b16 %v286
    %v875 = vunpack.c.h.b16 %v286
    %v876 = vunpack.c.l.b16 %v287
    %v877 = vunpack.c.h.b16 %v287
    %v878 = vunpack.c.l.b16 %v288
    %v879 = vunpack.c.h.b16 %v288
    %v880 = vunpack.c.l.b16 %v289
    %v881 = vunpack.c.h.b16 %v289
    %v882 = vunpack.c.l.b16 %v290
    %v883 = vunpack.c.h.b16 %v290
    %v884 = vunpack.c.l.b16 %v291
    %v885 = vunpack.c.h.b16 %v291
    %v886 = vunpack.c.l.b16 %v292
    %v887 = vunpack.c.h.b16 %v292
    %v888 = vunpack.c.l.b16 %v293
    %v889 = vunpack.c.h.b16 %v293
    %v890 = vunpack.c.l.b16 %v294
    %v891 = vunpack.c.h.b16 %v294
    %v892 = vunpack.c.l.b16 %v295
    %v893 = vunpack.c.h.b16 %v295
    %v894 = vpack.c.b16 %v514, %v510
    %v895 = vpack.c.b16 %v515, %v511
    %v896 = vpack.c.b16 %v516, %v512
    %v897 = vpack.c.b16 %v517, %v513
    %v898 = vpack.c.b16 %v522, %v518
    %v899 = vpack.c.b16 %v523, %v519
    %v900 = vpack.c.b16 %v524, %v520
    %v901 = vpack.c.b16 %v525, %v521
    %v902 = vpack.c.b16 %v530, %v526
    %v903 = vpack.c.b16 %v531, %v527
    %v904 = vpack.c.b16 %v532, %v528
    %v905 = vpack.c.b16 %v533, %v529
    %v906 = vpack.c.b16 %v538, %v534
    %v907 = vpack.c.b16 %v539, %v535
    %v908 = vpack.c.b16 %v540, %v536
    %v909 = vpack.c.b16 %v541, %v537
    %v910 = vpack.c.b16 %v546, %v542
    %v911 = vpack.c.b16 %v547, %v543
    %v912 = vpack.c.b16 %v548, %v544
    %v913 = vpack.c.b16 %v549, %v545
    %v914 = vpack.c.b16 %v554, %v550
    %v915 = vpack.c.b16 %v555, %v551
    %v916 = vpack.c.b16 %v556, %v552
    %v917 = vpack.c.b16 %v557, %v553
    %v918 = vpack.c.b16 %v562, %v558
    %v919 = vpack.c.b16 %v563, %v559
    %v920 = vpack.c.b16 %v564, %v560
    %v921 = vpack.c.b16 %v565, %v561
    %v922 = vpack.c.b16 %v570, %v566
    %v923 = vpack.c.b16 %v571, %v567
    %v924 = vpack.c.b16 %v572, %v568
    %v925 = vpack.c.b16 %v573, %v569
    %v926 = vpack.c.b16 %v578, %v574
    %v927 = vpack.c.b16 %v579, %v575
    %v928 = vpack.c.b16 %v580, %v576
    %v929 = vpack.c.b16 %v581, %v577
    %v930 = vpack.c.b16 %v586, %v582
    %v931 = vpack.c.b16 %v587, %v583
    %v932 = vpack.c.b16 %v588, %v584
    %v933 = vpack.c.b16 %v589, %v585
    %v934 = vpack.c.b16 %v594, %v590
    %v935 = vpack.c.b16 %v595, %v591
    %v936 = vpack.c.b16 %v596, %v592
    %v937 = vpack.c.b16 %v597, %v593
    %v938 = vpack.c.b16 %v602, %v598
    %v939 = vpack.c.b16 %v603, %v599
    %v940 = vpack.c.b16 %v604, %v600
    %v941 = vpack.c.b16 %v605, %v601
    %v942 = vpack.c.b16 %v610, %v606
    %v943 = vpack.c.b16 %v611, %v607
    %v944 = vpack.c.b16 %v612, %v608
    %v945 = vpack.c.b16 %v613, %v609
    %v946 = vpack.c.b16 %v618, %v614
    %v947 = vpack.c.b16 %v619, %v615
    %v948 = vpack.c.b16 %v620, %v616
    %v949 = vpack.c.b16 %v621, %v617
    %v950 = vpack.c.b16 %v626, %v622
    %v951 = vpack.c.b16 %v627, %v623
    %v952 = vpack.c.b16 %v628, %v624
    %v953 = vpack.c.b16 %v629, %v625
    %v954 = vpack.c.b16 %v634, %v630
    %v955 = vpack.c.b16 %v635, %v631
    %v956 = vpack.c.b16 %v636, %v632
    %v957 = vpack.c.b16 %v637, %v633
    %v958 = vpack.c.b16 %v642, %v638
    %v959 = vpack.c.b16 %v643, %v639
    %v960 = vpack.c.b16 %v644, %v640
    %v961 = vpack.c.b16 %v645, %v641
    %v962 = vpack.c.b16 %v650, %v646
    %v963 = vpack.c.b16 %v651, %v647
    %v964 = vpack.c.b16 %v652, %v648
    %v965 = vpack.c.b16 %v653, %v649
    %v966 = vpack.c.b16 %v658, %v654
    %v967 = vpack.c.b16 %v659, %v655
    %v968 = vpack.c.b16 %v660, %v656
    %v969 = vpack.c.b16 %v661, %v657
    %v970 = vpack.c.b16 %v666, %v662
    %v971 = vpack.c.b16 %v667, %v663
    %v972 = vpack.c.b16 %v668, %v664
    %v973 = vpack.c.b16 %v669, %v665
    %v974 = vpack.c.b16 %v674, %v670
    %v975 = vpack.c.b16 %v675, %v671
    %v976 = vpack.c.b16 %v676, %v672
    %v977 = vpack.c.b16 %v677, %v673
    %v978 = vpack.c.b16 %v682, %v678
    %v979 = vpack.c.b16 %v683, %v679
    %v980 = vpack.c.b16 %v684, %v680
    %v981 = vpack.c.b16 %v685, %v681
    %v982 = vpack.c.b16 %v690, %v686
    %v983 = vpack.c.b16 %v691, %v687
    %v984 = vpack.c.b16 %v692, %v688
    %v985 = vpack.c.b16 %v693, %v689
    %v986 = vpack.c.b16 %v698, %v694
    %v987 = vpack.c.b16 %v699, %v695
    %v988 = vpack.c.b16 %v700, %v696
    %v989 = vpack.c.b16 %v701, %v697
    %v990 = vpack.c.b16 %v706, %v702
    %v991 = vpack.c.b16 %v707, %v703
    %v992 = vpack.c.b16 %v708, %v704
    %v993 = vpack.c.b16 %v709, %v705
    %v994 = vpack.c.b16 %v714, %v710
    %v995 = vpack.c.b16 %v715, %v711
    %v996 = vpack.c.b16 %v716, %v712
    %v997 = vpack.c.b16 %v717, %v713
    %v998 = vpack.c.b16 %v722, %v718
    %v999 = vpack.c.b16 %v723, %v719
    %v1000 = vpack.c.b16 %v724, %v720
    %v1001 = vpack.c.b16 %v725, %v721
    %v1002 = vpack.c.b16 %v730, %v726
    %v1003 = vpack.c.b16 %v731, %v727
    %v1004 = vpack.c.b16 %v732, %v728
    %v1005 = vpack.c.b16 %v733, %v729
    %v1006 = vpack.c.b16 %v738, %v734
    %v1007 = vpack.c.b16 %v739, %v735
    %v1008 = vpack.c.b16 %v740, %v736
    %v1009 = vpack.c.b16 %v741, %v737
    %v1010 = vpack.c.b16 %v746, %v742
    %v1011 = vpack.c.b16 %v747, %v743
    %v1012 = vpack.c.b16 %v748, %v744
    %v1013 = vpack.c.b16 %v749, %v745
    %v1014 = vpack.c.b16 %v754, %v750
    %v1015 = vpack.c.b16 %v755, %v751
    %v1016 = vpack.c.b16 %v756, %v752
    %v1017 = vpack.c.b16 %v757, %v753
    %v1018 = vpack.c.b16 %v762, %v758
    %v1019 = vpack.c.b16 %v763, %v759
    %v1020 = vpack.c.b16 %v764, %v760
    %v1021 = vpack.c.b16 %v765, %v761
    %v1022 = vpack.c.b16 %v770, %v766
    %v1023 = vpack.c.b16 %v771, %v767
    %v1024 = vpack.c.b16 %v772, %v768
    %v1025 = vpack.c.b16 %v773, %v769
    %v1026 = vpack.c.b16 %v778, %v774
    %v1027 = vpack.c.b16 %v779, %v775
    %v1028 = vpack.c.b16 %v780, %v776
    %v1029 = vpack.c.b16 %v781, %v777
    %v1030 = vpack.c.b16 %v786, %v782
    %v1031 = vpack.c.b16 %v787, %v783
    %v1032 = vpack.c.b16 %v788, %v784
    %v1033 = vpack.c.b16 %v789, %v785
    %v1034 = vpack.c.b16 %v794, %v790
    %v1035 = vpack.c.b16 %v795, %v791
    %v1036 = vpack.c.b16 %v796, %v792
    %v1037 = vpack.c.b16 %v797, %v793
    %v1038 = vpack.c.b16 %v802, %v798
    %v1039 = vpack.c.b16 %v803, %v799
    %v1040 = vpack.c.b16 %v804, %v800
    %v1041 = vpack.c.b16 %v805, %v801
    %v1042 = vpack.c.b16 %v810, %v806
    %v1043 = vpack.c.b16 %v811, %v807
    %v1044 = vpack.c.b16 %v812, %v808
    %v1045 = vpack.c.b16 %v813, %v809
    %v1046 = vpack.c.b16 %v818, %v814
    %v1047 = vpack.c.b16 %v819, %v815
    %v1048 = vpack.c.b16 %v820, %v816
    %v1049 = vpack.c.b16 %v821, %v817
    %v1050 = vpack.c.b16 %v826, %v822
    %v1051 = vpack.c.b16 %v827, %v823
    %v1052 = vpack.c.b16 %v828, %v824
    %v1053 = vpack.c.b16 %v829, %v825
    %v1054 = vpack.c.b16 %v834, %v830
    %v1055 = vpack.c.b16 %v835, %v831
    %v1056 = vpack.c.b16 %v836, %v832
    %v1057 = vpack.c.b16 %v837, %v833
    %v1058 = vpack.c.b16 %v842, %v838
    %v1059 = vpack.c.b16 %v843, %v839
    %v1060 = vpack.c.b16 %v844, %v840
    %v1061 = vpack.c.b16 %v845, %v841
    %v1062 = vpack.c.b16 %v850, %v846
    %v1063 = vpack.c.b16 %v851, %v847
    %v1064 = vpack.c.b16 %v852, %v848
    %v1065 = vpack.c.b16 %v853, %v849
    %v1066 = vpack.c.b16 %v858, %v854
    %v1067 = vpack.c.b16 %v859, %v855
    %v1068 = vpack.c.b16 %v860, %v856
    %v1069 = vpack.c.b16 %v861, %v857
    %v1070 = vpack.c.b16 %v866, %v862
    %v1071 = vpack.c.b16 %v867, %v863
    %v1072 = vpack.c.b16 %v868, %v864
    %v1073 = vpack.c.b16 %v869, %v865
    %v1074 = vpack.c.b16 %v874, %v870
    %v1075 = vpack.c.b16 %v875, %v871
    %v1076 = vpack.c.b16 %v876, %v872
    %v1077 = vpack.c.b16 %v877, %v873
    %v1078 = vpack.c.b16 %v882, %v878
    %v1079 = vpack.c.b16 %v883, %v879
    %v1080 = vpack.c.b16 %v884, %v880
    %v1081 = vpack.c.b16 %v885, %v881
    %v1082 = vpack.c.b16 %v890, %v886
    %v1083 = vpack.c.b16 %v891, %v887
    %v1084 = vpack.c.b16 %v892, %v888
    %v1085 = vpack.c.b16 %v893, %v889
    %1278 = vmatprep.subr.bf16.mxu0 %v923
    %1279 = vmatpush1.bf16.msra.mxu0 %v922
    %1280 = vmatprep.subr.bf16.mxu0 %v919
    %1281 = vmatpush1.bf16.msra.mxu0 %v918
    %1282 = vmatprep.subr.bf16.mxu0 %v915
    %1283 = vmatpush1.bf16.msra.mxu0 %v914
    %1284 = vmatprep.subr.bf16.mxu0 %v911
    %1285 = vmatpush1.bf16.msra.mxu0 %v910
    %1286 = vmatprep.subr.bf16.mxu0 %v907
    %1287 = vmatpush1.bf16.msra.mxu0 %v906
    %1288 = vmatprep.subr.bf16.mxu0 %v903
    %1289 = vmatpush1.bf16.msra.mxu0 %v902
    %1290 = vmatprep.subr.bf16.mxu0 %v899
    %1291 = vmatpush1.bf16.msra.mxu0 %v898
    %1292 = vmatprep.subr.bf16.mxu0 %v895
    %1293 = vmatpush1.bf16.msra.mxu0 %v894
    %1294 = vmatprep.subr.bf16.mxu0 %v955
    %1295 = vmatpush2.bf16.msra.mxu0 %v954
    %1296 = vmatprep.subr.bf16.mxu0 %v951
    %1297 = vmatpush2.bf16.msra.mxu0 %v950
    %1298 = vmatprep.subr.bf16.mxu0 %v947
    %1299 = vmatpush2.bf16.msra.mxu0 %v946
    %1300 = vmatprep.subr.bf16.mxu0 %v943
    %1301 = vmatpush2.bf16.msra.mxu0 %v942
    %1302 = vmatprep.subr.bf16.mxu0 %v939
    %1303 = vmatpush2.bf16.msra.mxu0 %v938
    %1304 = vmatprep.subr.bf16.mxu0 %v935
    %1305 = vmatpush2.bf16.msra.mxu0 %v934
    %1306 = vmatprep.subr.bf16.mxu0 %v931
    %1307 = vmatpush2.bf16.msra.mxu0 %v930
    %1308 = vmatprep.subr.bf16.mxu0 %v927
    %1309 = vmatpush2.bf16.msra.mxu0 %v926
    %1310 = vmatprep.mubr.bf16.mxu0 %v99
    %1311 = vmatmul.mubr.bf16.gmra.mxu0 %v98
    %v1312 = vpop.f32.mrf.mxu0
    %v1313 = vadd.f32 %v301, %v1312
    %v1314 = vpop.f32.mrf.mxu0
    %v1315 = vadd.f32 %v305, %v1314
    %v1316 = vpop.f32.mrf.mxu0
    %v1317 = vpop.f32.mrf.mxu0
    %1318 = vdwg.mxu0
    %1319 = vmatprep.subr.bf16.mxu0 %v987
    %1320 = vmatpush1.bf16.msra.mxu0 %v986
    %1321 = vmatprep.subr.bf16.mxu0 %v983
    %1322 = vmatpush1.bf16.msra.mxu0 %v982
    %1323 = vmatprep.subr.bf16.mxu0 %v979
    %1324 = vmatpush1.bf16.msra.mxu0 %v978
    %1325 = vmatprep.subr.bf16.mxu0 %v975
    %1326 = vmatpush1.bf16.msra.mxu0 %v974
    %1327 = vmatprep.subr.bf16.mxu0 %v971
    %1328 = vmatpush1.bf16.msra.mxu0 %v970
    %1329 = vmatprep.subr.bf16.mxu0 %v967
    %1330 = vmatpush1.bf16.msra.mxu0 %v966
    %1331 = vmatprep.subr.bf16.mxu0 %v963
    %1332 = vmatpush1.bf16.msra.mxu0 %v962
    %1333 = vmatprep.subr.bf16.mxu0 %v959
    %1334 = vmatpush1.bf16.msra.mxu0 %v958
    %1335 = vmatprep.subr.bf16.mxu0 %v1019
    %1336 = vmatpush2.bf16.msra.mxu0 %v1018
    %1337 = vmatprep.subr.bf16.mxu0 %v1015
    %1338 = vmatpush2.bf16.msra.mxu0 %v1014
    %1339 = vmatprep.subr.bf16.mxu0 %v1011
    %1340 = vmatpush2.bf16.msra.mxu0 %v1010
    %1341 = vmatprep.subr.bf16.mxu0 %v1007
    %1342 = vmatpush2.bf16.msra.mxu0 %v1006
    %1343 = vmatprep.subr.bf16.mxu0 %v1003
    %1344 = vmatpush2.bf16.msra.mxu0 %v1002
    %1345 = vmatprep.subr.bf16.mxu0 %v999
    %1346 = vmatpush2.bf16.msra.mxu0 %v998
    %1347 = vmatprep.subr.bf16.mxu0 %v995
    %1348 = vmatpush2.bf16.msra.mxu0 %v994
    %1349 = vmatprep.subr.bf16.mxu0 %v991
    %1350 = vmatpush2.bf16.msra.mxu0 %v990
    %1351 = vmatprep.mubr.bf16.mxu0 %v101
    %1352 = vmatmul.mubr.bf16.gmra.mxu0 %v100
    %v1353 = vpop.f32.mrf.mxu0
    %v1354 = vadd.f32 %v1313, %v1353
    %v1355 = vpop.f32.mrf.mxu0
    %v1356 = vadd.f32 %v1315, %v1355
    %v1357 = vpop.f32.mrf.mxu0
    %v1358 = vpop.f32.mrf.mxu0
    %1359 = vdwg.mxu0
    %1360 = vmatprep.subr.bf16.mxu0 %v1051
    %1361 = vmatpush1.bf16.msra.mxu0 %v1050
    %1362 = vmatprep.subr.bf16.mxu0 %v1047
    %1363 = vmatpush1.bf16.msra.mxu0 %v1046
    %1364 = vmatprep.subr.bf16.mxu0 %v1043
    %1365 = vmatpush1.bf16.msra.mxu0 %v1042
    %1366 = vmatprep.subr.bf16.mxu0 %v1039
    %1367 = vmatpush1.bf16.msra.mxu0 %v1038
    %1368 = vmatprep.subr.bf16.mxu0 %v1035
    %1369 = vmatpush1.bf16.msra.mxu0 %v1034
    %1370 = vmatprep.subr.bf16.mxu0 %v1031
    %1371 = vmatpush1.bf16.msra.mxu0 %v1030
    %1372 = vmatprep.subr.bf16.mxu0 %v1027
    %1373 = vmatpush1.bf16.msra.mxu0 %v1026
    %1374 = vmatprep.subr.bf16.mxu0 %v1023
    %1375 = vmatpush1.bf16.msra.mxu0 %v1022
    %1376 = vmatprep.subr.bf16.mxu0 %v1083
    %1377 = vmatpush2.bf16.msra.mxu0 %v1082
    %1378 = vmatprep.subr.bf16.mxu0 %v1079
    %1379 = vmatpush2.bf16.msra.mxu0 %v1078
    %1380 = vmatprep.subr.bf16.mxu0 %v1075
    %1381 = vmatpush2.bf16.msra.mxu0 %v1074
    %1382 = vmatprep.subr.bf16.mxu0 %v1071
    %1383 = vmatpush2.bf16.msra.mxu0 %v1070
    %1384 = vmatprep.subr.bf16.mxu0 %v1067
    %1385 = vmatpush2.bf16.msra.mxu0 %v1066
    %1386 = vmatprep.subr.bf16.mxu0 %v1063
    %1387 = vmatpush2.bf16.msra.mxu0 %v1062
    %1388 = vmatprep.subr.bf16.mxu0 %v1059
    %1389 = vmatpush2.bf16.msra.mxu0 %v1058
    %1390 = vmatprep.subr.bf16.mxu0 %v1055
    %1391 = vmatpush2.bf16.msra.mxu0 %v1054
    %1392 = vmatprep.mubr.bf16.mxu0 %v103
    %1393 = vmatmul.mubr.bf16.gmra.mxu0 %v102
    %v1394 = vpop.f32.mrf.mxu0
    %v1395 = vadd.f32 %v1354, %v1394
    %v1396 = vpop.f32.mrf.mxu0
    %v1397 = vadd.f32 %v1356, %v1396
    %v1398 = vpop.f32.mrf.mxu0
    %v1399 = vpop.f32.mrf.mxu0
    %1400 = vdwg.mxu0
    %1401 = vmatprep.subr.bf16.mxu0 %v925
    %1402 = vmatpush1.bf16.msra.mxu0 %v924
    %1403 = vmatprep.subr.bf16.mxu0 %v921
    %1404 = vmatpush1.bf16.msra.mxu0 %v920
    %1405 = vmatprep.subr.bf16.mxu0 %v917
    %1406 = vmatpush1.bf16.msra.mxu0 %v916
    %1407 = vmatprep.subr.bf16.mxu0 %v913
    %1408 = vmatpush1.bf16.msra.mxu0 %v912
    %1409 = vmatprep.subr.bf16.mxu0 %v909
    %1410 = vmatpush1.bf16.msra.mxu0 %v908
    %1411 = vmatprep.subr.bf16.mxu0 %v905
    %1412 = vmatpush1.bf16.msra.mxu0 %v904
    %1413 = vmatprep.subr.bf16.mxu0 %v901
    %1414 = vmatpush1.bf16.msra.mxu0 %v900
    %1415 = vmatprep.subr.bf16.mxu0 %v897
    %1416 = vmatpush1.bf16.msra.mxu0 %v896
    %1417 = vmatprep.subr.bf16.mxu0 %v957
    %1418 = vmatpush2.bf16.msra.mxu0 %v956
    %1419 = vmatprep.subr.bf16.mxu0 %v953
    %1420 = vmatpush2.bf16.msra.mxu0 %v952
    %1421 = vmatprep.subr.bf16.mxu0 %v949
    %1422 = vmatpush2.bf16.msra.mxu0 %v948
    %1423 = vmatprep.subr.bf16.mxu0 %v945
    %1424 = vmatpush2.bf16.msra.mxu0 %v944
    %1425 = vmatprep.subr.bf16.mxu0 %v941
    %1426 = vmatpush2.bf16.msra.mxu0 %v940
    %1427 = vmatprep.subr.bf16.mxu0 %v937
    %1428 = vmatpush2.bf16.msra.mxu0 %v936
    %1429 = vmatprep.subr.bf16.mxu0 %v933
    %1430 = vmatpush2.bf16.msra.mxu0 %v932
    %1431 = vmatprep.subr.bf16.mxu0 %v929
    %1432 = vmatpush2.bf16.msra.mxu0 %v928
    %1433 = vmatprep.mubr.bf16.mxu0 %v99
    %1434 = vmatmul.mubr.bf16.gmra.mxu0 %v98
    %v1435 = vpop.f32.mrf.mxu0
    %v1436 = vadd.f32 %v309, %v1435
    %v1437 = vpop.f32.mrf.mxu0
    %v1438 = vadd.f32 %v313, %v1437
    %v1439 = vpop.f32.mrf.mxu0
    %v1440 = vpop.f32.mrf.mxu0
    %1441 = vdwg.mxu0
    %1442 = vmatprep.subr.bf16.mxu0 %v989
    %1443 = vmatpush1.bf16.msra.mxu0 %v988
    %1444 = vmatprep.subr.bf16.mxu0 %v985
    %1445 = vmatpush1.bf16.msra.mxu0 %v984
    %1446 = vmatprep.subr.bf16.mxu0 %v981
    %1447 = vmatpush1.bf16.msra.mxu0 %v980
    %1448 = vmatprep.subr.bf16.mxu0 %v977
    %1449 = vmatpush1.bf16.msra.mxu0 %v976
    %1450 = vmatprep.subr.bf16.mxu0 %v973
    %1451 = vmatpush1.bf16.msra.mxu0 %v972
    %1452 = vmatprep.subr.bf16.mxu0 %v969
    %1453 = vmatpush1.bf16.msra.mxu0 %v968
    %1454 = vmatprep.subr.bf16.mxu0 %v965
    %1455 = vmatpush1.bf16.msra.mxu0 %v964
    %1456 = vmatprep.subr.bf16.mxu0 %v961
    %1457 = vmatpush1.bf16.msra.mxu0 %v960
    %1458 = vmatprep.subr.bf16.mxu0 %v1021
    %1459 = vmatpush2.bf16.msra.mxu0 %v1020
    %1460 = vmatprep.subr.bf16.mxu0 %v1017
    %1461 = vmatpush2.bf16.msra.mxu0 %v1016
    %1462 = vmatprep.subr.bf16.mxu0 %v1013
    %1463 = vmatpush2.bf16.msra.mxu0 %v1012
    %1464 = vmatprep.subr.bf16.mxu0 %v1009
    %1465 = vmatpush2.bf16.msra.mxu0 %v1008
    %1466 = vmatprep.subr.bf16.mxu0 %v1005
    %1467 = vmatpush2.bf16.msra.mxu0 %v1004
    %1468 = vmatprep.subr.bf16.mxu0 %v1001
    %1469 = vmatpush2.bf16.msra.mxu0 %v1000
    %1470 = vmatprep.subr.bf16.mxu0 %v997
    %1471 = vmatpush2.bf16.msra.mxu0 %v996
    %1472 = vmatprep.subr.bf16.mxu0 %v993
    %1473 = vmatpush2.bf16.msra.mxu0 %v992
    %1474 = vmatprep.mubr.bf16.mxu0 %v101
    %1475 = vmatmul.mubr.bf16.gmra.mxu0 %v100
    %v1476 = vpop.f32.mrf.mxu0
    %v1477 = vadd.f32 %v1436, %v1476
    %v1478 = vpop.f32.mrf.mxu0
    %v1479 = vadd.f32 %v1438, %v1478
    %v1480 = vpop.f32.mrf.mxu0
    %v1481 = vpop.f32.mrf.mxu0
    %1482 = vdwg.mxu0
    %1483 = vmatprep.subr.bf16.mxu0 %v1053
    %1484 = vmatpush1.bf16.msra.mxu0 %v1052
    %1485 = vmatprep.subr.bf16.mxu0 %v1049
    %1486 = vmatpush1.bf16.msra.mxu0 %v1048
    %1487 = vmatprep.subr.bf16.mxu0 %v1045
    %1488 = vmatpush1.bf16.msra.mxu0 %v1044
    %1489 = vmatprep.subr.bf16.mxu0 %v1041
    %1490 = vmatpush1.bf16.msra.mxu0 %v1040
    %1491 = vmatprep.subr.bf16.mxu0 %v1037
    %1492 = vmatpush1.bf16.msra.mxu0 %v1036
    %1493 = vmatprep.subr.bf16.mxu0 %v1033
    %1494 = vmatpush1.bf16.msra.mxu0 %v1032
    %1495 = vmatprep.subr.bf16.mxu0 %v1029
    %1496 = vmatpush1.bf16.msra.mxu0 %v1028
    %1497 = vmatprep.subr.bf16.mxu0 %v1025
    %1498 = vmatpush1.bf16.msra.mxu0 %v1024
    %1499 = vmatprep.subr.bf16.mxu0 %v1085
    %1500 = vmatpush2.bf16.msra.mxu0 %v1084
    %1501 = vmatprep.subr.bf16.mxu0 %v1081
    %1502 = vmatpush2.bf16.msra.mxu0 %v1080
    %1503 = vmatprep.subr.bf16.mxu0 %v1077
    %1504 = vmatpush2.bf16.msra.mxu0 %v1076
    %1505 = vmatprep.subr.bf16.mxu0 %v1073
    %1506 = vmatpush2.bf16.msra.mxu0 %v1072
    %1507 = vmatprep.subr.bf16.mxu0 %v1069
    %1508 = vmatpush2.bf16.msra.mxu0 %v1068
    %1509 = vmatprep.subr.bf16.mxu0 %v1065
    %1510 = vmatpush2.bf16.msra.mxu0 %v1064
    %1511 = vmatprep.subr.bf16.mxu0 %v1061
    %1512 = vmatpush2.bf16.msra.mxu0 %v1060
    %1513 = vmatprep.subr.bf16.mxu0 %v1057
    %1514 = vmatpush2.bf16.msra.mxu0 %v1056
    %1515 = vmatprep.mubr.bf16.mxu0 %v103
    %1516 = vmatmul.mubr.bf16.gmra.mxu0 %v102
    %v1517 = vpop.f32.mrf.mxu0
    %v1518 = vadd.f32 %v1477, %v1517
    %v1519 = vpop.f32.mrf.mxu0
    %v1520 = vadd.f32 %v1479, %v1519
    %v1521 = vpop.f32.mrf.mxu0
    %v1522 = vpop.f32.mrf.mxu0
    %1523 = vdwg.mxu0
    %v1524 = vmax.f32 %v1395, 0.0
    %v1525 = vmax.f32 %v1397, 0.0
    %v1526 = vmax.f32 %v1518, 0.0
    %v1527 = vmax.f32 %v1520, 0.0
    %v1528 = vpack.c.bf16 %v1524, %v1524
    %v1529 = vpack.c.bf16 %v1525, %v1525
    %v1530 = vpack.c.bf16 %v1526, %v1526
    %v1531 = vpack.c.bf16 %v1527, %v1527
    %v1532 = vld [vmem:[#allocation8] sm:$0xff]
    %v1533 = vld [vmem:[#allocation8 + $0x8] sm:$0xff]
    %v1534 = vld [vmem:[#allocation8 + $0x10] sm:$0xff]
    %v1535 = vld [vmem:[#allocation8 + $0x18] sm:$0xff]
    %v1536 = vld [vmem:[#allocation8 + $0x20] sm:$0xff]
    %v1537 = vld [vmem:[#allocation8 + $0x28] sm:$0xff]
    %v1538 = vld [vmem:[#allocation8 + $0x30] sm:$0xff]
    %v1539 = vld [vmem:[#allocation8 + $0x38] sm:$0xff]
    %v1540 = vld [vmem:[#allocation8 + $0x40] sm:$0xff]
    %v1541 = vld [vmem:[#allocation8 + $0x48] sm:$0xff]
    %v1542 = vld [vmem:[#allocation8 + $0x50] sm:$0xff]
    %v1543 = vld [vmem:[#allocation8 + $0x58] sm:$0xff]
    %v1544 = vld [vmem:[#allocation8 + $0x60] sm:$0xff]
    %v1545 = vld [vmem:[#allocation8 + $0x68] sm:$0xff]
    %v1546 = vld [vmem:[#allocation8 + $0x70] sm:$0xff]
    %v1547 = vld [vmem:[#allocation8 + $0x78] sm:$0xff]
    %v1548 = vld [vmem:[#allocation8 + $0x80] sm:$0xff]
    %v1549 = vld [vmem:[#allocation8 + $0x88] sm:$0xff]
    %v1550 = vld [vmem:[#allocation8 + $0x90] sm:$0xff]
    %v1551 = vld [vmem:[#allocation8 + $0x98] sm:$0xff]
    %v1552 = vld [vmem:[#allocation8 + $0xa0] sm:$0xff]
    %v1553 = vld [vmem:[#allocation8 + $0xa8] sm:$0xff]
    %v1554 = vld [vmem:[#allocation8 + $0xb0] sm:$0xff]
    %v1555 = vld [vmem:[#allocation8 + $0xb8] sm:$0xff]
    %v1556 = vld [vmem:[#allocation8 + $0xc0] sm:$0xff]
    %v1557 = vld [vmem:[#allocation8 + $0xc8] sm:$0xff]
    %v1558 = vld [vmem:[#allocation8 + $0xd0] sm:$0xff]
    %v1559 = vld [vmem:[#allocation8 + $0xd8] sm:$0xff]
    %v1560 = vld [vmem:[#allocation8 + $0xe0] sm:$0xff]
    %v1561 = vld [vmem:[#allocation8 + $0xe8] sm:$0xff]
    %v1562 = vld [vmem:[#allocation8 + $0xf0] sm:$0xff]
    %v1563 = vld [vmem:[#allocation8 + $0xf8] sm:$0xff]
    %v1564 = vld [vmem:[#allocation8 + $0x100] sm:$0xff]
    %v1565 = vld [vmem:[#allocation8 + $0x108] sm:$0xff]
    %v1566 = vld [vmem:[#allocation8 + $0x110] sm:$0xff]
    %v1567 = vld [vmem:[#allocation8 + $0x118] sm:$0xff]
    %v1568 = vld [vmem:[#allocation8 + $0x120] sm:$0xff]
    %v1569 = vld [vmem:[#allocation8 + $0x128] sm:$0xff]
    %v1570 = vld [vmem:[#allocation8 + $0x130] sm:$0xff]
    %v1571 = vld [vmem:[#allocation8 + $0x138] sm:$0xff]
    %v1572 = vld [vmem:[#allocation8 + $0x140] sm:$0xff]
    %v1573 = vld [vmem:[#allocation8 + $0x148] sm:$0xff]
    %v1574 = vld [vmem:[#allocation8 + $0x150] sm:$0xff]
    %v1575 = vld [vmem:[#allocation8 + $0x158] sm:$0xff]
    %v1576 = vld [vmem:[#allocation8 + $0x160] sm:$0xff]
    %v1577 = vld [vmem:[#allocation8 + $0x168] sm:$0xff]
    %v1578 = vld [vmem:[#allocation8 + $0x170] sm:$0xff]
    %v1579 = vld [vmem:[#allocation8 + $0x178] sm:$0xff]
    %v1580 = vld [vmem:[#allocation8 + $0x180] sm:$0xff]
    %v1581 = vld [vmem:[#allocation8 + $0x188] sm:$0xff]
    %v1582 = vld [vmem:[#allocation8 + $0x190] sm:$0xff]
    %v1583 = vld [vmem:[#allocation8 + $0x198] sm:$0xff]
    %v1584 = vld [vmem:[#allocation8 + $0x1a0] sm:$0xff]
    %v1585 = vld [vmem:[#allocation8 + $0x1a8] sm:$0xff]
    %v1586 = vld [vmem:[#allocation8 + $0x1b0] sm:$0xff]
    %v1587 = vld [vmem:[#allocation8 + $0x1b8] sm:$0xff]
    %v1588 = vld [vmem:[#allocation8 + $0x1c0] sm:$0xff]
    %v1589 = vld [vmem:[#allocation8 + $0x1c8] sm:$0xff]
    %v1590 = vld [vmem:[#allocation8 + $0x1d0] sm:$0xff]
    %v1591 = vld [vmem:[#allocation8 + $0x1d8] sm:$0xff]
    %v1592 = vld [vmem:[#allocation8 + $0x1e0] sm:$0xff]
    %v1593 = vld [vmem:[#allocation8 + $0x1e8] sm:$0xff]
    %v1594 = vld [vmem:[#allocation8 + $0x1f0] sm:$0xff]
    %v1595 = vld [vmem:[#allocation8 + $0x1f8] sm:$0xff]
    %v1596 = vld [vmem:[#allocation8 + $0x200] sm:$0xff]
    %v1597 = vld [vmem:[#allocation8 + $0x208] sm:$0xff]
    %v1598 = vld [vmem:[#allocation8 + $0x210] sm:$0xff]
    %v1599 = vld [vmem:[#allocation8 + $0x218] sm:$0xff]
    %v1600 = vld [vmem:[#allocation8 + $0x220] sm:$0xff]
    %v1601 = vld [vmem:[#allocation8 + $0x228] sm:$0xff]
    %v1602 = vld [vmem:[#allocation8 + $0x230] sm:$0xff]
    %v1603 = vld [vmem:[#allocation8 + $0x238] sm:$0xff]
    %v1604 = vld [vmem:[#allocation8 + $0x240] sm:$0xff]
    %v1605 = vld [vmem:[#allocation8 + $0x248] sm:$0xff]
    %v1606 = vld [vmem:[#allocation8 + $0x250] sm:$0xff]
    %v1607 = vld [vmem:[#allocation8 + $0x258] sm:$0xff]
    %v1608 = vld [vmem:[#allocation8 + $0x260] sm:$0xff]
    %v1609 = vld [vmem:[#allocation8 + $0x268] sm:$0xff]
    %v1610 = vld [vmem:[#allocation8 + $0x270] sm:$0xff]
    %v1611 = vld [vmem:[#allocation8 + $0x278] sm:$0xff]
    %v1612 = vld [vmem:[#allocation8 + $0x280] sm:$0xff]
    %v1613 = vld [vmem:[#allocation8 + $0x288] sm:$0xff]
    %v1614 = vld [vmem:[#allocation8 + $0x290] sm:$0xff]
    %v1615 = vld [vmem:[#allocation8 + $0x298] sm:$0xff]
    %v1616 = vld [vmem:[#allocation8 + $0x2a0] sm:$0xff]
    %v1617 = vld [vmem:[#allocation8 + $0x2a8] sm:$0xff]
    %v1618 = vld [vmem:[#allocation8 + $0x2b0] sm:$0xff]
    %v1619 = vld [vmem:[#allocation8 + $0x2b8] sm:$0xff]
    %v1620 = vld [vmem:[#allocation8 + $0x2c0] sm:$0xff]
    %v1621 = vld [vmem:[#allocation8 + $0x2c8] sm:$0xff]
    %v1622 = vld [vmem:[#allocation8 + $0x2d0] sm:$0xff]
    %v1623 = vld [vmem:[#allocation8 + $0x2d8] sm:$0xff]
    %v1624 = vld [vmem:[#allocation8 + $0x2e0] sm:$0xff]
    %v1625 = vld [vmem:[#allocation8 + $0x2e8] sm:$0xff]
    %v1626 = vld [vmem:[#allocation8 + $0x2f0] sm:$0xff]
    %v1627 = vld [vmem:[#allocation8 + $0x2f8] sm:$0xff]
    %v1628 = vld [vmem:[#allocation8 + $0x300] sm:$0xff]
    %v1629 = vld [vmem:[#allocation8 + $0x308] sm:$0xff]
    %v1630 = vld [vmem:[#allocation8 + $0x310] sm:$0xff]
    %v1631 = vld [vmem:[#allocation8 + $0x318] sm:$0xff]
    %v1632 = vld [vmem:[#allocation8 + $0x320] sm:$0xff]
    %v1633 = vld [vmem:[#allocation8 + $0x328] sm:$0xff]
    %v1634 = vld [vmem:[#allocation8 + $0x330] sm:$0xff]
    %v1635 = vld [vmem:[#allocation8 + $0x338] sm:$0xff]
    %v1636 = vld [vmem:[#allocation8 + $0x340] sm:$0xff]
    %v1637 = vld [vmem:[#allocation8 + $0x348] sm:$0xff]
    %v1638 = vld [vmem:[#allocation8 + $0x350] sm:$0xff]
    %v1639 = vld [vmem:[#allocation8 + $0x358] sm:$0xff]
    %v1640 = vld [vmem:[#allocation8 + $0x360] sm:$0xff]
    %v1641 = vld [vmem:[#allocation8 + $0x368] sm:$0xff]
    %v1642 = vld [vmem:[#allocation8 + $0x370] sm:$0xff]
    %v1643 = vld [vmem:[#allocation8 + $0x378] sm:$0xff]
    %v1644 = vld [vmem:[#allocation8 + $0x380] sm:$0xff]
    %v1645 = vld [vmem:[#allocation8 + $0x388] sm:$0xff]
    %v1646 = vld [vmem:[#allocation8 + $0x390] sm:$0xff]
    %v1647 = vld [vmem:[#allocation8 + $0x398] sm:$0xff]
    %v1648 = vld [vmem:[#allocation8 + $0x3a0] sm:$0xff]
    %v1649 = vld [vmem:[#allocation8 + $0x3a8] sm:$0xff]
    %v1650 = vld [vmem:[#allocation8 + $0x3b0] sm:$0xff]
    %v1651 = vld [vmem:[#allocation8 + $0x3b8] sm:$0xff]
    %v1652 = vld [vmem:[#allocation8 + $0x3c0] sm:$0xff]
    %v1653 = vld [vmem:[#allocation8 + $0x3c8] sm:$0xff]
    %v1654 = vld [vmem:[#allocation8 + $0x3d0] sm:$0xff]
    %v1655 = vld [vmem:[#allocation8 + $0x3d8] sm:$0xff]
    %v1656 = vld [vmem:[#allocation8 + $0x3e0] sm:$0xff]
    %v1657 = vld [vmem:[#allocation8 + $0x3e8] sm:$0xff]
    %v1658 = vld [vmem:[#allocation8 + $0x3f0] sm:$0xff]
    %v1659 = vld [vmem:[#allocation8 + $0x3f8] sm:$0xff]
    %v1660 = vld [vmem:[%s4] sm:$0xf]
    %v1662 = vlaneseq
    %v1663 = vshrl.u32 %v1662, 7
    %v1664 = vsub.s32 0, %v1663
    %v1665 = vrot.slane %v1660, %v1664
    %v1666 = vlaneseq
    %v1667 = vshrl.u32 %v1666, 7
    %v1668 = vsub.s32 1, %v1667
    %v1669 = vrot.slane %v1660, %v1668
    %v1670 = vlaneseq
    %v1671 = vshrl.u32 %v1670, 7
    %v1672 = vsub.s32 2, %v1671
    %v1673 = vrot.slane %v1660, %v1672
    %v1674 = vlaneseq
    %v1675 = vshrl.u32 %v1674, 7
    %v1676 = vsub.s32 3, %v1675
    %v1677 = vrot.slane %v1660, %v1676
    %v1810 = vunpack.c.l.b16 %v1532
    %v1811 = vunpack.c.h.b16 %v1532
    %v1812 = vunpack.c.l.b16 %v1533
    %v1813 = vunpack.c.h.b16 %v1533
    %v1814 = vunpack.c.l.b16 %v1534
    %v1815 = vunpack.c.h.b16 %v1534
    %v1816 = vunpack.c.l.b16 %v1535
    %v1817 = vunpack.c.h.b16 %v1535
    %v1818 = vunpack.c.l.b16 %v1536
    %v1819 = vunpack.c.h.b16 %v1536
    %v1820 = vunpack.c.l.b16 %v1537
    %v1821 = vunpack.c.h.b16 %v1537
    %v1822 = vunpack.c.l.b16 %v1538
    %v1823 = vunpack.c.h.b16 %v1538
    %v1824 = vunpack.c.l.b16 %v1539
    %v1825 = vunpack.c.h.b16 %v1539
    %v1826 = vunpack.c.l.b16 %v1540
    %v1827 = vunpack.c.h.b16 %v1540
    %v1828 = vunpack.c.l.b16 %v1541
    %v1829 = vunpack.c.h.b16 %v1541
    %v1830 = vunpack.c.l.b16 %v1542
    %v1831 = vunpack.c.h.b16 %v1542
    %v1832 = vunpack.c.l.b16 %v1543
    %v1833 = vunpack.c.h.b16 %v1543
    %v1834 = vunpack.c.l.b16 %v1544
    %v1835 = vunpack.c.h.b16 %v1544
    %v1836 = vunpack.c.l.b16 %v1545
    %v1837 = vunpack.c.h.b16 %v1545
    %v1838 = vunpack.c.l.b16 %v1546
    %v1839 = vunpack.c.h.b16 %v1546
    %v1840 = vunpack.c.l.b16 %v1547
    %v1841 = vunpack.c.h.b16 %v1547
    %v1842 = vunpack.c.l.b16 %v1548
    %v1843 = vunpack.c.h.b16 %v1548
    %v1844 = vunpack.c.l.b16 %v1549
    %v1845 = vunpack.c.h.b16 %v1549
    %v1846 = vunpack.c.l.b16 %v1550
    %v1847 = vunpack.c.h.b16 %v1550
    %v1848 = vunpack.c.l.b16 %v1551
    %v1849 = vunpack.c.h.b16 %v1551
    %v1850 = vunpack.c.l.b16 %v1552
    %v1851 = vunpack.c.h.b16 %v1552
    %v1852 = vunpack.c.l.b16 %v1553
    %v1853 = vunpack.c.h.b16 %v1553
    %v1854 = vunpack.c.l.b16 %v1554
    %v1855 = vunpack.c.h.b16 %v1554
    %v1856 = vunpack.c.l.b16 %v1555
    %v1857 = vunpack.c.h.b16 %v1555
    %v1858 = vunpack.c.l.b16 %v1556
    %v1859 = vunpack.c.h.b16 %v1556
    %v1860 = vunpack.c.l.b16 %v1557
    %v1861 = vunpack.c.h.b16 %v1557
    %v1862 = vunpack.c.l.b16 %v1558
    %v1863 = vunpack.c.h.b16 %v1558
    %v1864 = vunpack.c.l.b16 %v1559
    %v1865 = vunpack.c.h.b16 %v1559
    %v1866 = vunpack.c.l.b16 %v1560
    %v1867 = vunpack.c.h.b16 %v1560
    %v1868 = vunpack.c.l.b16 %v1561
    %v1869 = vunpack.c.h.b16 %v1561
    %v1870 = vunpack.c.l.b16 %v1562
    %v1871 = vunpack.c.h.b16 %v1562
    %v1872 = vunpack.c.l.b16 %v1563
    %v1873 = vunpack.c.h.b16 %v1563
    %v1874 = vunpack.c.l.b16 %v1564
    %v1875 = vunpack.c.h.b16 %v1564
    %v1876 = vunpack.c.l.b16 %v1565
    %v1877 = vunpack.c.h.b16 %v1565
    %v1878 = vunpack.c.l.b16 %v1566
    %v1879 = vunpack.c.h.b16 %v1566
    %v1880 = vunpack.c.l.b16 %v1567
    %v1881 = vunpack.c.h.b16 %v1567
    %v1882 = vunpack.c.l.b16 %v1568
    %v1883 = vunpack.c.h.b16 %v1568
    %v1884 = vunpack.c.l.b16 %v1569
    %v1885 = vunpack.c.h.b16 %v1569
    %v1886 = vunpack.c.l.b16 %v1570
    %v1887 = vunpack.c.h.b16 %v1570
    %v1888 = vunpack.c.l.b16 %v1571
    %v1889 = vunpack.c.h.b16 %v1571
    %v1890 = vunpack.c.l.b16 %v1572
    %v1891 = vunpack.c.h.b16 %v1572
    %v1892 = vunpack.c.l.b16 %v1573
    %v1893 = vunpack.c.h.b16 %v1573
    %v1894 = vunpack.c.l.b16 %v1574
    %v1895 = vunpack.c.h.b16 %v1574
    %v1896 = vunpack.c.l.b16 %v1575
    %v1897 = vunpack.c.h.b16 %v1575
    %v1898 = vunpack.c.l.b16 %v1576
    %v1899 = vunpack.c.h.b16 %v1576
    %v1900 = vunpack.c.l.b16 %v1577
    %v1901 = vunpack.c.h.b16 %v1577
    %v1902 = vunpack.c.l.b16 %v1578
    %v1903 = vunpack.c.h.b16 %v1578
    %v1904 = vunpack.c.l.b16 %v1579
    %v1905 = vunpack.c.h.b16 %v1579
    %v1906 = vunpack.c.l.b16 %v1580
    %v1907 = vunpack.c.h.b16 %v1580
    %v1908 = vunpack.c.l.b16 %v1581
    %v1909 = vunpack.c.h.b16 %v1581
    %v1910 = vunpack.c.l.b16 %v1582
    %v1911 = vunpack.c.h.b16 %v1582
    %v1912 = vunpack.c.l.b16 %v1583
    %v1913 = vunpack.c.h.b16 %v1583
    %v1914 = vunpack.c.l.b16 %v1584
    %v1915 = vunpack.c.h.b16 %v1584
    %v1916 = vunpack.c.l.b16 %v1585
    %v1917 = vunpack.c.h.b16 %v1585
    %v1918 = vunpack.c.l.b16 %v1586
    %v1919 = vunpack.c.h.b16 %v1586
    %v1920 = vunpack.c.l.b16 %v1587
    %v1921 = vunpack.c.h.b16 %v1587
    %v1922 = vunpack.c.l.b16 %v1588
    %v1923 = vunpack.c.h.b16 %v1588
    %v1924 = vunpack.c.l.b16 %v1589
    %v1925 = vunpack.c.h.b16 %v1589
    %v1926 = vunpack.c.l.b16 %v1590
    %v1927 = vunpack.c.h.b16 %v1590
    %v1928 = vunpack.c.l.b16 %v1591
    %v1929 = vunpack.c.h.b16 %v1591
    %v1930 = vunpack.c.l.b16 %v1592
    %v1931 = vunpack.c.h.b16 %v1592
    %v1932 = vunpack.c.l.b16 %v1593
    %v1933 = vunpack.c.h.b16 %v1593
    %v1934 = vunpack.c.l.b16 %v1594
    %v1935 = vunpack.c.h.b16 %v1594
    %v1936 = vunpack.c.l.b16 %v1595
    %v1937 = vunpack.c.h.b16 %v1595
    %v1938 = vunpack.c.l.b16 %v1596
    %v1939 = vunpack.c.h.b16 %v1596
    %v1940 = vunpack.c.l.b16 %v1597
    %v1941 = vunpack.c.h.b16 %v1597
    %v1942 = vunpack.c.l.b16 %v1598
    %v1943 = vunpack.c.h.b16 %v1598
    %v1944 = vunpack.c.l.b16 %v1599
    %v1945 = vunpack.c.h.b16 %v1599
    %v1946 = vunpack.c.l.b16 %v1600
    %v1947 = vunpack.c.h.b16 %v1600
    %v1948 = vunpack.c.l.b16 %v1601
    %v1949 = vunpack.c.h.b16 %v1601
    %v1950 = vunpack.c.l.b16 %v1602
    %v1951 = vunpack.c.h.b16 %v1602
    %v1952 = vunpack.c.l.b16 %v1603
    %v1953 = vunpack.c.h.b16 %v1603
    %v1954 = vunpack.c.l.b16 %v1604
    %v1955 = vunpack.c.h.b16 %v1604
    %v1956 = vunpack.c.l.b16 %v1605
    %v1957 = vunpack.c.h.b16 %v1605
    %v1958 = vunpack.c.l.b16 %v1606
    %v1959 = vunpack.c.h.b16 %v1606
    %v1960 = vunpack.c.l.b16 %v1607
    %v1961 = vunpack.c.h.b16 %v1607
    %v1962 = vunpack.c.l.b16 %v1608
    %v1963 = vunpack.c.h.b16 %v1608
    %v1964 = vunpack.c.l.b16 %v1609
    %v1965 = vunpack.c.h.b16 %v1609
    %v1966 = vunpack.c.l.b16 %v1610
    %v1967 = vunpack.c.h.b16 %v1610
    %v1968 = vunpack.c.l.b16 %v1611
    %v1969 = vunpack.c.h.b16 %v1611
    %v1970 = vunpack.c.l.b16 %v1612
    %v1971 = vunpack.c.h.b16 %v1612
    %v1972 = vunpack.c.l.b16 %v1613
    %v1973 = vunpack.c.h.b16 %v1613
    %v1974 = vunpack.c.l.b16 %v1614
    %v1975 = vunpack.c.h.b16 %v1614
    %v1976 = vunpack.c.l.b16 %v1615
    %v1977 = vunpack.c.h.b16 %v1615
    %v1978 = vunpack.c.l.b16 %v1616
    %v1979 = vunpack.c.h.b16 %v1616
    %v1980 = vunpack.c.l.b16 %v1617
    %v1981 = vunpack.c.h.b16 %v1617
    %v1982 = vunpack.c.l.b16 %v1618
    %v1983 = vunpack.c.h.b16 %v1618
    %v1984 = vunpack.c.l.b16 %v1619
    %v1985 = vunpack.c.h.b16 %v1619
    %v1986 = vunpack.c.l.b16 %v1620
    %v1987 = vunpack.c.h.b16 %v1620
    %v1988 = vunpack.c.l.b16 %v1621
    %v1989 = vunpack.c.h.b16 %v1621
    %v1990 = vunpack.c.l.b16 %v1622
    %v1991 = vunpack.c.h.b16 %v1622
    %v1992 = vunpack.c.l.b16 %v1623
    %v1993 = vunpack.c.h.b16 %v1623
    %v1994 = vunpack.c.l.b16 %v1624
    %v1995 = vunpack.c.h.b16 %v1624
    %v1996 = vunpack.c.l.b16 %v1625
    %v1997 = vunpack.c.h.b16 %v1625
    %v1998 = vunpack.c.l.b16 %v1626
    %v1999 = vunpack.c.h.b16 %v1626
    %v2000 = vunpack.c.l.b16 %v1627
    %v2001 = vunpack.c.h.b16 %v1627
    %v2002 = vunpack.c.l.b16 %v1628
    %v2003 = vunpack.c.h.b16 %v1628
    %v2004 = vunpack.c.l.b16 %v1629
    %v2005 = vunpack.c.h.b16 %v1629
    %v2006 = vunpack.c.l.b16 %v1630
    %v2007 = vunpack.c.h.b16 %v1630
    %v2008 = vunpack.c.l.b16 %v1631
    %v2009 = vunpack.c.h.b16 %v1631
    %v2010 = vunpack.c.l.b16 %v1632
    %v2011 = vunpack.c.h.b16 %v1632
    %v2012 = vunpack.c.l.b16 %v1633
    %v2013 = vunpack.c.h.b16 %v1633
    %v2014 = vunpack.c.l.b16 %v1634
    %v2015 = vunpack.c.h.b16 %v1634
    %v2016 = vunpack.c.l.b16 %v1635
    %v2017 = vunpack.c.h.b16 %v1635
    %v2018 = vunpack.c.l.b16 %v1636
    %v2019 = vunpack.c.h.b16 %v1636
    %v2020 = vunpack.c.l.b16 %v1637
    %v2021 = vunpack.c.h.b16 %v1637
    %v2022 = vunpack.c.l.b16 %v1638
    %v2023 = vunpack.c.h.b16 %v1638
    %v2024 = vunpack.c.l.b16 %v1639
    %v2025 = vunpack.c.h.b16 %v1639
    %v2026 = vunpack.c.l.b16 %v1640
    %v2027 = vunpack.c.h.b16 %v1640
    %v2028 = vunpack.c.l.b16 %v1641
    %v2029 = vunpack.c.h.b16 %v1641
    %v2030 = vunpack.c.l.b16 %v1642
    %v2031 = vunpack.c.h.b16 %v1642
    %v2032 = vunpack.c.l.b16 %v1643
    %v2033 = vunpack.c.h.b16 %v1643
    %v2034 = vunpack.c.l.b16 %v1644
    %v2035 = vunpack.c.h.b16 %v1644
    %v2036 = vunpack.c.l.b16 %v1645
    %v2037 = vunpack.c.h.b16 %v1645
    %v2038 = vunpack.c.l.b16 %v1646
    %v2039 = vunpack.c.h.b16 %v1646
    %v2040 = vunpack.c.l.b16 %v1647
    %v2041 = vunpack.c.h.b16 %v1647
    %v2042 = vunpack.c.l.b16 %v1648
    %v2043 = vunpack.c.h.b16 %v1648
    %v2044 = vunpack.c.l.b16 %v1649
    %v2045 = vunpack.c.h.b16 %v1649
    %v2046 = vunpack.c.l.b16 %v1650
    %v2047 = vunpack.c.h.b16 %v1650
    %v2048 = vunpack.c.l.b16 %v1651
    %v2049 = vunpack.c.h.b16 %v1651
    %v2050 = vunpack.c.l.b16 %v1652
    %v2051 = vunpack.c.h.b16 %v1652
    %v2052 = vunpack.c.l.b16 %v1653
    %v2053 = vunpack.c.h.b16 %v1653
    %v2054 = vunpack.c.l.b16 %v1654
    %v2055 = vunpack.c.h.b16 %v1654
    %v2056 = vunpack.c.l.b16 %v1655
    %v2057 = vunpack.c.h.b16 %v1655
    %v2058 = vunpack.c.l.b16 %v1656
    %v2059 = vunpack.c.h.b16 %v1656
    %v2060 = vunpack.c.l.b16 %v1657
    %v2061 = vunpack.c.h.b16 %v1657
    %v2062 = vunpack.c.l.b16 %v1658
    %v2063 = vunpack.c.h.b16 %v1658
    %v2064 = vunpack.c.l.b16 %v1659
    %v2065 = vunpack.c.h.b16 %v1659
    %v2066 = vpack.c.b16 %v1814, %v1810
    %v2067 = vpack.c.b16 %v1815, %v1811
    %v2068 = vpack.c.b16 %v1816, %v1812
    %v2069 = vpack.c.b16 %v1817, %v1813
    %v2070 = vpack.c.b16 %v1822, %v1818
    %v2071 = vpack.c.b16 %v1823, %v1819
    %v2072 = vpack.c.b16 %v1824, %v1820
    %v2073 = vpack.c.b16 %v1825, %v1821
    %v2074 = vpack.c.b16 %v1830, %v1826
    %v2075 = vpack.c.b16 %v1831, %v1827
    %v2076 = vpack.c.b16 %v1832, %v1828
    %v2077 = vpack.c.b16 %v1833, %v1829
    %v2078 = vpack.c.b16 %v1838, %v1834
    %v2079 = vpack.c.b16 %v1839, %v1835
    %v2080 = vpack.c.b16 %v1840, %v1836
    %v2081 = vpack.c.b16 %v1841, %v1837
    %v2082 = vpack.c.b16 %v1846, %v1842
    %v2083 = vpack.c.b16 %v1847, %v1843
    %v2084 = vpack.c.b16 %v1848, %v1844
    %v2085 = vpack.c.b16 %v1849, %v1845
    %v2086 = vpack.c.b16 %v1854, %v1850
    %v2087 = vpack.c.b16 %v1855, %v1851
    %v2088 = vpack.c.b16 %v1856, %v1852
    %v2089 = vpack.c.b16 %v1857, %v1853
    %v2090 = vpack.c.b16 %v1862, %v1858
    %v2091 = vpack.c.b16 %v1863, %v1859
    %v2092 = vpack.c.b16 %v1864, %v1860
    %v2093 = vpack.c.b16 %v1865, %v1861
    %v2094 = vpack.c.b16 %v1870, %v1866
    %v2095 = vpack.c.b16 %v1871, %v1867
    %v2096 = vpack.c.b16 %v1872, %v1868
    %v2097 = vpack.c.b16 %v1873, %v1869
    %v2098 = vpack.c.b16 %v1878, %v1874
    %v2099 = vpack.c.b16 %v1879, %v1875
    %v2100 = vpack.c.b16 %v1880, %v1876
    %v2101 = vpack.c.b16 %v1881, %v1877
    %v2102 = vpack.c.b16 %v1886, %v1882
    %v2103 = vpack.c.b16 %v1887, %v1883
    %v2104 = vpack.c.b16 %v1888, %v1884
    %v2105 = vpack.c.b16 %v1889, %v1885
    %v2106 = vpack.c.b16 %v1894, %v1890
    %v2107 = vpack.c.b16 %v1895, %v1891
    %v2108 = vpack.c.b16 %v1896, %v1892
    %v2109 = vpack.c.b16 %v1897, %v1893
    %v2110 = vpack.c.b16 %v1902, %v1898
    %v2111 = vpack.c.b16 %v1903, %v1899
    %v2112 = vpack.c.b16 %v1904, %v1900
    %v2113 = vpack.c.b16 %v1905, %v1901
    %v2114 = vpack.c.b16 %v1910, %v1906
    %v2115 = vpack.c.b16 %v1911, %v1907
    %v2116 = vpack.c.b16 %v1912, %v1908
    %v2117 = vpack.c.b16 %v1913, %v1909
    %v2118 = vpack.c.b16 %v1918, %v1914
    %v2119 = vpack.c.b16 %v1919, %v1915
    %v2120 = vpack.c.b16 %v1920, %v1916
    %v2121 = vpack.c.b16 %v1921, %v1917
    %v2122 = vpack.c.b16 %v1926, %v1922
    %v2123 = vpack.c.b16 %v1927, %v1923
    %v2124 = vpack.c.b16 %v1928, %v1924
    %v2125 = vpack.c.b16 %v1929, %v1925
    %v2126 = vpack.c.b16 %v1934, %v1930
    %v2127 = vpack.c.b16 %v1935, %v1931
    %v2128 = vpack.c.b16 %v1936, %v1932
    %v2129 = vpack.c.b16 %v1937, %v1933
    %v2130 = vpack.c.b16 %v1942, %v1938
    %v2131 = vpack.c.b16 %v1943, %v1939
    %v2132 = vpack.c.b16 %v1944, %v1940
    %v2133 = vpack.c.b16 %v1945, %v1941
    %v2134 = vpack.c.b16 %v1950, %v1946
    %v2135 = vpack.c.b16 %v1951, %v1947
    %v2136 = vpack.c.b16 %v1952, %v1948
    %v2137 = vpack.c.b16 %v1953, %v1949
    %v2138 = vpack.c.b16 %v1958, %v1954
    %v2139 = vpack.c.b16 %v1959, %v1955
    %v2140 = vpack.c.b16 %v1960, %v1956
    %v2141 = vpack.c.b16 %v1961, %v1957
    %v2142 = vpack.c.b16 %v1966, %v1962
    %v2143 = vpack.c.b16 %v1967, %v1963
    %v2144 = vpack.c.b16 %v1968, %v1964
    %v2145 = vpack.c.b16 %v1969, %v1965
    %v2146 = vpack.c.b16 %v1974, %v1970
    %v2147 = vpack.c.b16 %v1975, %v1971
    %v2148 = vpack.c.b16 %v1976, %v1972
    %v2149 = vpack.c.b16 %v1977, %v1973
    %v2150 = vpack.c.b16 %v1982, %v1978
    %v2151 = vpack.c.b16 %v1983, %v1979
    %v2152 = vpack.c.b16 %v1984, %v1980
    %v2153 = vpack.c.b16 %v1985, %v1981
    %v2154 = vpack.c.b16 %v1990, %v1986
    %v2155 = vpack.c.b16 %v1991, %v1987
    %v2156 = vpack.c.b16 %v1992, %v1988
    %v2157 = vpack.c.b16 %v1993, %v1989
    %v2158 = vpack.c.b16 %v1998, %v1994
    %v2159 = vpack.c.b16 %v1999, %v1995
    %v2160 = vpack.c.b16 %v2000, %v1996
    %v2161 = vpack.c.b16 %v2001, %v1997
    %v2162 = vpack.c.b16 %v2006, %v2002
    %v2163 = vpack.c.b16 %v2007, %v2003
    %v2164 = vpack.c.b16 %v2008, %v2004
    %v2165 = vpack.c.b16 %v2009, %v2005
    %v2166 = vpack.c.b16 %v2014, %v2010
    %v2167 = vpack.c.b16 %v2015, %v2011
    %v2168 = vpack.c.b16 %v2016, %v2012
    %v2169 = vpack.c.b16 %v2017, %v2013
    %v2170 = vpack.c.b16 %v2022, %v2018
    %v2171 = vpack.c.b16 %v2023, %v2019
    %v2172 = vpack.c.b16 %v2024, %v2020
    %v2173 = vpack.c.b16 %v2025, %v2021
    %v2174 = vpack.c.b16 %v2030, %v2026
    %v2175 = vpack.c.b16 %v2031, %v2027
    %v2176 = vpack.c.b16 %v2032, %v2028
    %v2177 = vpack.c.b16 %v2033, %v2029
    %v2178 = vpack.c.b16 %v2038, %v2034
    %v2179 = vpack.c.b16 %v2039, %v2035
    %v2180 = vpack.c.b16 %v2040, %v2036
    %v2181 = vpack.c.b16 %v2041, %v2037
    %v2182 = vpack.c.b16 %v2046, %v2042
    %v2183 = vpack.c.b16 %v2047, %v2043
    %v2184 = vpack.c.b16 %v2048, %v2044
    %v2185 = vpack.c.b16 %v2049, %v2045
    %v2186 = vpack.c.b16 %v2054, %v2050
    %v2187 = vpack.c.b16 %v2055, %v2051
    %v2188 = vpack.c.b16 %v2056, %v2052
    %v2189 = vpack.c.b16 %v2057, %v2053
    %v2190 = vpack.c.b16 %v2062, %v2058
    %v2191 = vpack.c.b16 %v2063, %v2059
    %v2192 = vpack.c.b16 %v2064, %v2060
    %v2193 = vpack.c.b16 %v2065, %v2061
    %2322 = vmatprep.subr.bf16.mxu0 %v2095
    %2323 = vmatpush1.bf16.msra.mxu0 %v2094
    %2324 = vmatprep.subr.bf16.mxu0 %v2091
    %2325 = vmatpush1.bf16.msra.mxu0 %v2090
    %2326 = vmatprep.subr.bf16.mxu0 %v2087
    %2327 = vmatpush1.bf16.msra.mxu0 %v2086
    %2328 = vmatprep.subr.bf16.mxu0 %v2083
    %2329 = vmatpush1.bf16.msra.mxu0 %v2082
    %2330 = vmatprep.subr.bf16.mxu0 %v2079
    %2331 = vmatpush1.bf16.msra.mxu0 %v2078
    %2332 = vmatprep.subr.bf16.mxu0 %v2075
    %2333 = vmatpush1.bf16.msra.mxu0 %v2074
    %2334 = vmatprep.subr.bf16.mxu0 %v2071
    %2335 = vmatpush1.bf16.msra.mxu0 %v2070
    %2336 = vmatprep.subr.bf16.mxu0 %v2067
    %2337 = vmatpush1.bf16.msra.mxu0 %v2066
    %2338 = vmatprep.subr.bf16.mxu0 %v2127
    %2339 = vmatpush2.bf16.msra.mxu0 %v2126
    %2340 = vmatprep.subr.bf16.mxu0 %v2123
    %2341 = vmatpush2.bf16.msra.mxu0 %v2122
    %2342 = vmatprep.subr.bf16.mxu0 %v2119
    %2343 = vmatpush2.bf16.msra.mxu0 %v2118
    %2344 = vmatprep.subr.bf16.mxu0 %v2115
    %2345 = vmatpush2.bf16.msra.mxu0 %v2114
    %2346 = vmatprep.subr.bf16.mxu0 %v2111
    %2347 = vmatpush2.bf16.msra.mxu0 %v2110
    %2348 = vmatprep.subr.bf16.mxu0 %v2107
    %2349 = vmatpush2.bf16.msra.mxu0 %v2106
    %2350 = vmatprep.subr.bf16.mxu0 %v2103
    %2351 = vmatpush2.bf16.msra.mxu0 %v2102
    %2352 = vmatprep.subr.bf16.mxu0 %v2099
    %2353 = vmatpush2.bf16.msra.mxu0 %v2098
    %2354 = vmatprep.mubr.bf16.mxu0 %v1529
    %2355 = vmatmul.mubr.bf16.gmra.mxu0 %v1528
    %v2356 = vpop.f32.mrf.mxu0
    %v2357 = vadd.f32 %v1665, %v2356
    %v2358 = vpop.f32.mrf.mxu0
    %v2359 = vadd.f32 %v1669, %v2358
    %v2360 = vpop.f32.mrf.mxu0
    %v2361 = vpop.f32.mrf.mxu0
    %2362 = vdwg.mxu0
    %2363 = vmatprep.subr.bf16.mxu0 %v2159
    %2364 = vmatpush1.bf16.msra.mxu0 %v2158
    %2365 = vmatprep.subr.bf16.mxu0 %v2155
    %2366 = vmatpush1.bf16.msra.mxu0 %v2154
    %2367 = vmatprep.subr.bf16.mxu0 %v2151
    %2368 = vmatpush1.bf16.msra.mxu0 %v2150
    %2369 = vmatprep.subr.bf16.mxu0 %v2147
    %2370 = vmatpush1.bf16.msra.mxu0 %v2146
    %2371 = vmatprep.subr.bf16.mxu0 %v2143
    %2372 = vmatpush1.bf16.msra.mxu0 %v2142
    %2373 = vmatprep.subr.bf16.mxu0 %v2139
    %2374 = vmatpush1.bf16.msra.mxu0 %v2138
    %2375 = vmatprep.subr.bf16.mxu0 %v2135
    %2376 = vmatpush1.bf16.msra.mxu0 %v2134
    %2377 = vmatprep.subr.bf16.mxu0 %v2131
    %2378 = vmatpush1.bf16.msra.mxu0 %v2130
    %2379 = vmatprep.subr.bf16.mxu0 %v2191
    %2380 = vmatpush2.bf16.msra.mxu0 %v2190
    %2381 = vmatprep.subr.bf16.mxu0 %v2187
    %2382 = vmatpush2.bf16.msra.mxu0 %v2186
    %2383 = vmatprep.subr.bf16.mxu0 %v2183
    %2384 = vmatpush2.bf16.msra.mxu0 %v2182
    %2385 = vmatprep.subr.bf16.mxu0 %v2179
    %2386 = vmatpush2.bf16.msra.mxu0 %v2178
    %2387 = vmatprep.subr.bf16.mxu0 %v2175
    %2388 = vmatpush2.bf16.msra.mxu0 %v2174
    %2389 = vmatprep.subr.bf16.mxu0 %v2171
    %2390 = vmatpush2.bf16.msra.mxu0 %v2170
    %2391 = vmatprep.subr.bf16.mxu0 %v2167
    %2392 = vmatpush2.bf16.msra.mxu0 %v2166
    %2393 = vmatprep.subr.bf16.mxu0 %v2163
    %2394 = vmatpush2.bf16.msra.mxu0 %v2162
    %2395 = vmatprep.mubr.bf16.mxu0 %v1531
    %2396 = vmatmul.mubr.bf16.gmra.mxu0 %v1530
    %v2397 = vpop.f32.mrf.mxu0
    %v2398 = vadd.f32 %v2357, %v2397
    %v2399 = vpop.f32.mrf.mxu0
    %v2400 = vadd.f32 %v2359, %v2399
    %v2401 = vpop.f32.mrf.mxu0
    %v2402 = vpop.f32.mrf.mxu0
    %2403 = vdwg.mxu0
    %2404 = vmatprep.subr.bf16.mxu0 %v2097
    %2405 = vmatpush1.bf16.msra.mxu0 %v2096
    %2406 = vmatprep.subr.bf16.mxu0 %v2093
    %2407 = vmatpush1.bf16.msra.mxu0 %v2092
    %2408 = vmatprep.subr.bf16.mxu0 %v2089
    %2409 = vmatpush1.bf16.msra.mxu0 %v2088
    %2410 = vmatprep.subr.bf16.mxu0 %v2085
    %2411 = vmatpush1.bf16.msra.mxu0 %v2084
    %2412 = vmatprep.subr.bf16.mxu0 %v2081
    %2413 = vmatpush1.bf16.msra.mxu0 %v2080
    %2414 = vmatprep.subr.bf16.mxu0 %v2077
    %2415 = vmatpush1.bf16.msra.mxu0 %v2076
    %2416 = vmatprep.subr.bf16.mxu0 %v2073
    %2417 = vmatpush1.bf16.msra.mxu0 %v2072
    %2418 = vmatprep.subr.bf16.mxu0 %v2069
    %2419 = vmatpush1.bf16.msra.mxu0 %v2068
    %2420 = vmatprep.subr.bf16.mxu0 %v2129
    %2421 = vmatpush2.bf16.msra.mxu0 %v2128
    %2422 = vmatprep.subr.bf16.mxu0 %v2125
    %2423 = vmatpush2.bf16.msra.mxu0 %v2124
    %2424 = vmatprep.subr.bf16.mxu0 %v2121
    %2425 = vmatpush2.bf16.msra.mxu0 %v2120
    %2426 = vmatprep.subr.bf16.mxu0 %v2117
    %2427 = vmatpush2.bf16.msra.mxu0 %v2116
    %2428 = vmatprep.subr.bf16.mxu0 %v2113
    %2429 = vmatpush2.bf16.msra.mxu0 %v2112
    %2430 = vmatprep.subr.bf16.mxu0 %v2109
    %2431 = vmatpush2.bf16.msra.mxu0 %v2108
    %2432 = vmatprep.subr.bf16.mxu0 %v2105
    %2433 = vmatpush2.bf16.msra.mxu0 %v2104
    %2434 = vmatprep.subr.bf16.mxu0 %v2101
    %2435 = vmatpush2.bf16.msra.mxu0 %v2100
    %2436 = vmatprep.mubr.bf16.mxu0 %v1529
    %2437 = vmatmul.mubr.bf16.gmra.mxu0 %v1528
    %v2438 = vpop.f32.mrf.mxu0
    %v2439 = vadd.f32 %v1673, %v2438
    %v2440 = vpop.f32.mrf.mxu0
    %v2441 = vadd.f32 %v1677, %v2440
    %v2442 = vpop.f32.mrf.mxu0
    %v2443 = vpop.f32.mrf.mxu0
    %2444 = vdwg.mxu0
    %2445 = vmatprep.subr.bf16.mxu0 %v2161
    %2446 = vmatpush1.bf16.msra.mxu0 %v2160
    %2447 = vmatprep.subr.bf16.mxu0 %v2157
    %2448 = vmatpush1.bf16.msra.mxu0 %v2156
    %2449 = vmatprep.subr.bf16.mxu0 %v2153
    %2450 = vmatpush1.bf16.msra.mxu0 %v2152
    %2451 = vmatprep.subr.bf16.mxu0 %v2149
    %2452 = vmatpush1.bf16.msra.mxu0 %v2148
    %2453 = vmatprep.subr.bf16.mxu0 %v2145
    %2454 = vmatpush1.bf16.msra.mxu0 %v2144
    %2455 = vmatprep.subr.bf16.mxu0 %v2141
    %2456 = vmatpush1.bf16.msra.mxu0 %v2140
    %2457 = vmatprep.subr.bf16.mxu0 %v2137
    %2458 = vmatpush1.bf16.msra.mxu0 %v2136
    %2459 = vmatprep.subr.bf16.mxu0 %v2133
    %2460 = vmatpush1.bf16.msra.mxu0 %v2132
    %2461 = vmatprep.subr.bf16.mxu0 %v2193
    %2462 = vmatpush2.bf16.msra.mxu0 %v2192
    %2463 = vmatprep.subr.bf16.mxu0 %v2189
    %2464 = vmatpush2.bf16.msra.mxu0 %v2188
    %2465 = vmatprep.subr.bf16.mxu0 %v2185
    %2466 = vmatpush2.bf16.msra.mxu0 %v2184
    %2467 = vmatprep.subr.bf16.mxu0 %v2181
    %2468 = vmatpush2.bf16.msra.mxu0 %v2180
    %2469 = vmatprep.subr.bf16.mxu0 %v2177
    %2470 = vmatpush2.bf16.msra.mxu0 %v2176
    %2471 = vmatprep.subr.bf16.mxu0 %v2173
    %2472 = vmatpush2.bf16.msra.mxu0 %v2172
    %2473 = vmatprep.subr.bf16.mxu0 %v2169
    %2474 = vmatpush2.bf16.msra.mxu0 %v2168
    %2475 = vmatprep.subr.bf16.mxu0 %v2165
    %2476 = vmatpush2.bf16.msra.mxu0 %v2164
    %2477 = vmatprep.mubr.bf16.mxu0 %v1531
    %2478 = vmatmul.mubr.bf16.gmra.mxu0 %v1530
    %v2479 = vpop.f32.mrf.mxu0
    %v2480 = vadd.f32 %v2439, %v2479
    %v2481 = vpop.f32.mrf.mxu0
    %v2482 = vadd.f32 %v2441, %v2481
    %v2483 = vpop.f32.mrf.mxu0
    %v2484 = vpop.f32.mrf.mxu0
    %2485 = vdwg.mxu0
    %v2486 = vmax.f32 %v2398, 0.0
    %v2487 = vmax.f32 %v2400, 0.0
    %v2488 = vmax.f32 %v2480, 0.0
    %v2489 = vmax.f32 %v2482, 0.0
    %v2490 = vpack.c.bf16 %v2486, %v2486
    %v2491 = vpack.c.bf16 %v2487, %v2487
    %v2492 = vpack.c.bf16 %v2488, %v2488
    %v2493 = vpack.c.bf16 %v2489, %v2489
    %v2494 = vld [vmem:[#allocation10] sm:$0xf]
    %v2495 = vld [vmem:[#allocation10 + $0x4] sm:$0xf]
    %v2496 = vld [vmem:[#allocation10 + $0x8] sm:$0xf]
    %v2497 = vld [vmem:[#allocation10 + $0xc] sm:$0xf]
    %v2498 = vld [vmem:[#allocation10 + $0x10] sm:$0xf]
    %v2499 = vld [vmem:[#allocation10 + $0x14] sm:$0xf]
    %v2500 = vld [vmem:[#allocation10 + $0x18] sm:$0xf]
    %v2501 = vld [vmem:[#allocation10 + $0x1c] sm:$0xf]
    %v2502 = vld [vmem:[#allocation10 + $0x20] sm:$0xf]
    %v2503 = vld [vmem:[#allocation10 + $0x24] sm:$0xf]
    %v2504 = vld [vmem:[#allocation10 + $0x28] sm:$0xf]
    %v2505 = vld [vmem:[#allocation10 + $0x2c] sm:$0xf]
    %v2506 = vld [vmem:[#allocation10 + $0x30] sm:$0xf]
    %v2507 = vld [vmem:[#allocation10 + $0x34] sm:$0xf]
    %v2508 = vld [vmem:[#allocation10 + $0x38] sm:$0xf]
    %v2509 = vld [vmem:[#allocation10 + $0x3c] sm:$0xf]
    %v2510 = vld [vmem:[#allocation10 + $0x40] sm:$0xf]
    %v2511 = vld [vmem:[#allocation10 + $0x44] sm:$0xf]
    %v2512 = vld [vmem:[#allocation10 + $0x48] sm:$0xf]
    %v2513 = vld [vmem:[#allocation10 + $0x4c] sm:$0xf]
    %v2514 = vld [vmem:[#allocation10 + $0x50] sm:$0xf]
    %v2515 = vld [vmem:[#allocation10 + $0x54] sm:$0xf]
    %v2516 = vld [vmem:[#allocation10 + $0x58] sm:$0xf]
    %v2517 = vld [vmem:[#allocation10 + $0x5c] sm:$0xf]
    %v2518 = vld [vmem:[#allocation10 + $0x60] sm:$0xf]
    %v2519 = vld [vmem:[#allocation10 + $0x64] sm:$0xf]
    %v2520 = vld [vmem:[#allocation10 + $0x68] sm:$0xf]
    %v2521 = vld [vmem:[#allocation10 + $0x6c] sm:$0xf]
    %v2522 = vld [vmem:[#allocation10 + $0x70] sm:$0xf]
    %v2523 = vld [vmem:[#allocation10 + $0x74] sm:$0xf]
    %v2524 = vld [vmem:[#allocation10 + $0x78] sm:$0xf]
    %v2525 = vld [vmem:[#allocation10 + $0x7c] sm:$0xf]
    %v2526 = vld [vmem:[#allocation10 + $0x80] sm:$0xf]
    %v2527 = vld [vmem:[#allocation10 + $0x84] sm:$0xf]
    %v2528 = vld [vmem:[#allocation10 + $0x88] sm:$0xf]
    %v2529 = vld [vmem:[#allocation10 + $0x8c] sm:$0xf]
    %v2530 = vld [vmem:[#allocation10 + $0x90] sm:$0xf]
    %v2531 = vld [vmem:[#allocation10 + $0x94] sm:$0xf]
    %v2532 = vld [vmem:[#allocation10 + $0x98] sm:$0xf]
    %v2533 = vld [vmem:[#allocation10 + $0x9c] sm:$0xf]
    %v2534 = vld [vmem:[#allocation10 + $0xa0] sm:$0xf]
    %v2535 = vld [vmem:[#allocation10 + $0xa4] sm:$0xf]
    %v2536 = vld [vmem:[#allocation10 + $0xa8] sm:$0xf]
    %v2537 = vld [vmem:[#allocation10 + $0xac] sm:$0xf]
    %v2538 = vld [vmem:[#allocation10 + $0xb0] sm:$0xf]
    %v2539 = vld [vmem:[#allocation10 + $0xb4] sm:$0xf]
    %v2540 = vld [vmem:[#allocation10 + $0xb8] sm:$0xf]
    %v2541 = vld [vmem:[#allocation10 + $0xbc] sm:$0xf]
    %v2542 = vld [vmem:[#allocation10 + $0xc0] sm:$0xf]
    %v2543 = vld [vmem:[#allocation10 + $0xc4] sm:$0xf]
    %v2544 = vld [vmem:[#allocation10 + $0xc8] sm:$0xf]
    %v2545 = vld [vmem:[#allocation10 + $0xcc] sm:$0xf]
    %v2546 = vld [vmem:[#allocation10 + $0xd0] sm:$0xf]
    %v2547 = vld [vmem:[#allocation10 + $0xd4] sm:$0xf]
    %v2548 = vld [vmem:[#allocation10 + $0xd8] sm:$0xf]
    %v2549 = vld [vmem:[#allocation10 + $0xdc] sm:$0xf]
    %v2550 = vld [vmem:[#allocation10 + $0xe0] sm:$0xf]
    %v2551 = vld [vmem:[#allocation10 + $0xe4] sm:$0xf]
    %v2552 = vld [vmem:[#allocation10 + $0xe8] sm:$0xf]
    %v2553 = vld [vmem:[#allocation10 + $0xec] sm:$0xf]
    %v2554 = vld [vmem:[#allocation10 + $0xf0] sm:$0xf]
    %v2555 = vld [vmem:[#allocation10 + $0xf4] sm:$0xf]
    %v2556 = vld [vmem:[#allocation10 + $0xf8] sm:$0xf]
    %v2557 = vld [vmem:[#allocation10 + $0xfc] sm:$0xf]
    %v2558 = vld [vmem:[%s6] sm:$0x1]
    %v2560 = vlaneseq
    %v2561 = vshrl.u32 %v2560, 7
    %v2562 = vsub.s32 0, %v2561
    %v2563 = vrot.slane %v2558, %v2562
    %v2629 = vunpack.c.l.b16 %v2494
    %v2630 = vunpack.c.l.b16 %v2495
    %v2631 = vunpack.c.l.b16 %v2496
    %v2632 = vunpack.c.l.b16 %v2497
    %v2633 = vunpack.c.l.b16 %v2498
    %v2634 = vunpack.c.l.b16 %v2499
    %v2635 = vunpack.c.l.b16 %v2500
    %v2636 = vunpack.c.l.b16 %v2501
    %v2637 = vunpack.c.l.b16 %v2502
    %v2638 = vunpack.c.l.b16 %v2503
    %v2639 = vunpack.c.l.b16 %v2504
    %v2640 = vunpack.c.l.b16 %v2505
    %v2641 = vunpack.c.l.b16 %v2506
    %v2642 = vunpack.c.l.b16 %v2507
    %v2643 = vunpack.c.l.b16 %v2508
    %v2644 = vunpack.c.l.b16 %v2509
    %v2645 = vunpack.c.l.b16 %v2510
    %v2646 = vunpack.c.l.b16 %v2511
    %v2647 = vunpack.c.l.b16 %v2512
    %v2648 = vunpack.c.l.b16 %v2513
    %v2649 = vunpack.c.l.b16 %v2514
    %v2650 = vunpack.c.l.b16 %v2515
    %v2651 = vunpack.c.l.b16 %v2516
    %v2652 = vunpack.c.l.b16 %v2517
    %v2653 = vunpack.c.l.b16 %v2518
    %v2654 = vunpack.c.l.b16 %v2519
    %v2655 = vunpack.c.l.b16 %v2520
    %v2656 = vunpack.c.l.b16 %v2521
    %v2657 = vunpack.c.l.b16 %v2522
    %v2658 = vunpack.c.l.b16 %v2523
    %v2659 = vunpack.c.l.b16 %v2524
    %v2660 = vunpack.c.l.b16 %v2525
    %v2661 = vunpack.c.l.b16 %v2526
    %v2662 = vunpack.c.l.b16 %v2527
    %v2663 = vunpack.c.l.b16 %v2528
    %v2664 = vunpack.c.l.b16 %v2529
    %v2665 = vunpack.c.l.b16 %v2530
    %v2666 = vunpack.c.l.b16 %v2531
    %v2667 = vunpack.c.l.b16 %v2532
    %v2668 = vunpack.c.l.b16 %v2533
    %v2669 = vunpack.c.l.b16 %v2534
    %v2670 = vunpack.c.l.b16 %v2535
    %v2671 = vunpack.c.l.b16 %v2536
    %v2672 = vunpack.c.l.b16 %v2537
    %v2673 = vunpack.c.l.b16 %v2538
    %v2674 = vunpack.c.l.b16 %v2539
    %v2675 = vunpack.c.l.b16 %v2540
    %v2676 = vunpack.c.l.b16 %v2541
    %v2677 = vunpack.c.l.b16 %v2542
    %v2678 = vunpack.c.l.b16 %v2543
    %v2679 = vunpack.c.l.b16 %v2544
    %v2680 = vunpack.c.l.b16 %v2545
    %v2681 = vunpack.c.l.b16 %v2546
    %v2682 = vunpack.c.l.b16 %v2547
    %v2683 = vunpack.c.l.b16 %v2548
    %v2684 = vunpack.c.l.b16 %v2549
    %v2685 = vunpack.c.l.b16 %v2550
    %v2686 = vunpack.c.l.b16 %v2551
    %v2687 = vunpack.c.l.b16 %v2552
    %v2688 = vunpack.c.l.b16 %v2553
    %v2689 = vunpack.c.l.b16 %v2554
    %v2690 = vunpack.c.l.b16 %v2555
    %v2691 = vunpack.c.l.b16 %v2556
    %v2692 = vunpack.c.l.b16 %v2557
    %v2693 = vpack.c.b16 %v2630, %v2629
    %v2694 = vpack.c.b16 %v2632, %v2631
    %v2695 = vpack.c.b16 %v2634, %v2633
    %v2696 = vpack.c.b16 %v2636, %v2635
    %v2697 = vpack.c.b16 %v2638, %v2637
    %v2698 = vpack.c.b16 %v2640, %v2639
    %v2699 = vpack.c.b16 %v2642, %v2641
    %v2700 = vpack.c.b16 %v2644, %v2643
    %v2701 = vpack.c.b16 %v2646, %v2645
    %v2702 = vpack.c.b16 %v2648, %v2647
    %v2703 = vpack.c.b16 %v2650, %v2649
    %v2704 = vpack.c.b16 %v2652, %v2651
    %v2705 = vpack.c.b16 %v2654, %v2653
    %v2706 = vpack.c.b16 %v2656, %v2655
    %v2707 = vpack.c.b16 %v2658, %v2657
    %v2708 = vpack.c.b16 %v2660, %v2659
    %v2709 = vpack.c.b16 %v2662, %v2661
    %v2710 = vpack.c.b16 %v2664, %v2663
    %v2711 = vpack.c.b16 %v2666, %v2665
    %v2712 = vpack.c.b16 %v2668, %v2667
    %v2713 = vpack.c.b16 %v2670, %v2669
    %v2714 = vpack.c.b16 %v2672, %v2671
    %v2715 = vpack.c.b16 %v2674, %v2673
    %v2716 = vpack.c.b16 %v2676, %v2675
    %v2717 = vpack.c.b16 %v2678, %v2677
    %v2718 = vpack.c.b16 %v2680, %v2679
    %v2719 = vpack.c.b16 %v2682, %v2681
    %v2720 = vpack.c.b16 %v2684, %v2683
    %v2721 = vpack.c.b16 %v2686, %v2685
    %v2722 = vpack.c.b16 %v2688, %v2687
    %v2723 = vpack.c.b16 %v2690, %v2689
    %v2724 = vpack.c.b16 %v2692, %v2691
    %2757 = vmatprep.subr.bf16.mxu0 0
    %2758 = vmatpush1.bf16.msra.mxu0 %v2700
    %2759 = vmatprep.subr.bf16.mxu0 0
    %2760 = vmatpush1.bf16.msra.mxu0 %v2699
    %2761 = vmatprep.subr.bf16.mxu0 0
    %2762 = vmatpush1.bf16.msra.mxu0 %v2698
    %2763 = vmatprep.subr.bf16.mxu0 0
    %2764 = vmatpush1.bf16.msra.mxu0 %v2697
    %2765 = vmatprep.subr.bf16.mxu0 0
    %2766 = vmatpush1.bf16.msra.mxu0 %v2696
    %2767 = vmatprep.subr.bf16.mxu0 0
    %2768 = vmatpush1.bf16.msra.mxu0 %v2695
    %2769 = vmatprep.subr.bf16.mxu0 0
    %2770 = vmatpush1.bf16.msra.mxu0 %v2694
    %2771 = vmatprep.subr.bf16.mxu0 0
    %2772 = vmatpush1.bf16.msra.mxu0 %v2693
    %2773 = vmatprep.subr.bf16.mxu0 0
    %2774 = vmatpush2.bf16.msra.mxu0 %v2708
    %2775 = vmatprep.subr.bf16.mxu0 0
    %2776 = vmatpush2.bf16.msra.mxu0 %v2707
    %2777 = vmatprep.subr.bf16.mxu0 0
    %2778 = vmatpush2.bf16.msra.mxu0 %v2706
    %2779 = vmatprep.subr.bf16.mxu0 0
    %2780 = vmatpush2.bf16.msra.mxu0 %v2705
    %2781 = vmatprep.subr.bf16.mxu0 0
    %2782 = vmatpush2.bf16.msra.mxu0 %v2704
    %2783 = vmatprep.subr.bf16.mxu0 0
    %2784 = vmatpush2.bf16.msra.mxu0 %v2703
    %2785 = vmatprep.subr.bf16.mxu0 0
    %2786 = vmatpush2.bf16.msra.mxu0 %v2702
    %2787 = vmatprep.subr.bf16.mxu0 0
    %2788 = vmatpush2.bf16.msra.mxu0 %v2701
    %2789 = vmatprep.mubr.bf16.mxu0 %v2491
    %2790 = vmatmul.mubr.bf16.gmra.mxu0 %v2490
    %v2791 = vpop.f32.mrf.mxu0
    %v2792 = vadd.f32 %v2563, %v2791
    %v2793 = vpop.f32.mrf.mxu0
    %v2794 = vpop.f32.mrf.mxu0
    %v2795 = vpop.f32.mrf.mxu0
    %2796 = vdwg.mxu0
    %2797 = vmatprep.subr.bf16.mxu0 0
    %2798 = vmatpush1.bf16.msra.mxu0 %v2716
    %2799 = vmatprep.subr.bf16.mxu0 0
    %2800 = vmatpush1.bf16.msra.mxu0 %v2715
    %2801 = vmatprep.subr.bf16.mxu0 0
    %2802 = vmatpush1.bf16.msra.mxu0 %v2714
    %2803 = vmatprep.subr.bf16.mxu0 0
    %2804 = vmatpush1.bf16.msra.mxu0 %v2713
    %2805 = vmatprep.subr.bf16.mxu0 0
    %2806 = vmatpush1.bf16.msra.mxu0 %v2712
    %2807 = vmatprep.subr.bf16.mxu0 0
    %2808 = vmatpush1.bf16.msra.mxu0 %v2711
    %2809 = vmatprep.subr.bf16.mxu0 0
    %2810 = vmatpush1.bf16.msra.mxu0 %v2710
    %2811 = vmatprep.subr.bf16.mxu0 0
    %2812 = vmatpush1.bf16.msra.mxu0 %v2709
    %2813 = vmatprep.subr.bf16.mxu0 0
    %2814 = vmatpush2.bf16.msra.mxu0 %v2724
    %2815 = vmatprep.subr.bf16.mxu0 0
    %2816 = vmatpush2.bf16.msra.mxu0 %v2723
    %2817 = vmatprep.subr.bf16.mxu0 0
    %2818 = vmatpush2.bf16.msra.mxu0 %v2722
    %2819 = vmatprep.subr.bf16.mxu0 0
    %2820 = vmatpush2.bf16.msra.mxu0 %v2721
    %2821 = vmatprep.subr.bf16.mxu0 0
    %2822 = vmatpush2.bf16.msra.mxu0 %v2720
    %2823 = vmatprep.subr.bf16.mxu0 0
    %2824 = vmatpush2.bf16.msra.mxu0 %v2719
    %2825 = vmatprep.subr.bf16.mxu0 0
    %2826 = vmatpush2.bf16.msra.mxu0 %v2718
    %2827 = vmatprep.subr.bf16.mxu0 0
    %2828 = vmatpush2.bf16.msra.mxu0 %v2717
    %2829 = vmatprep.mubr.bf16.mxu0 %v2493
    %2830 = vmatmul.mubr.bf16.gmra.mxu0 %v2492
    %v2831 = vpop.f32.mrf.mxu0
    %v2832 = vadd.f32 %v2792, %v2831
    %v2833 = vpop.f32.mrf.mxu0
    %v2834 = vpop.f32.mrf.mxu0
    %v2835 = vpop.f32.mrf.mxu0
    %2836 = vdwg.mxu0
    %2837 = vst [vmem:[#allocation11] sm:$0xff] %v2832
    // Predicated region
    $region50: #{tpu_custom_call.1} parent=1 // pred_check
      _
    $region51: #{tpu_custom_call.1} parent=1 // pred_check_branch
      %2839 = sbr.rel (0) target = $region53
    $region52: #{tpu_custom_call.1} parent=1 // pred_region
      %s2841 = ssub.s32 128, 128
      %2842 = vsyncadd [#allocation4], %s2841
      %s2844 = sshll.u32 [#allocation11], 4
      %s2845 = int_to_ptr.vmem [resolvable:$true] %s2844
      %2847 = dma.vmem_to_hbm [thread:$0]  %s2845, 128, %s7, [#allocation4]
    $region53: #{tpu_custom_call.1} parent=1 // pred_fallthru
      _
    // Predicated region
    $region54: #{tpu_custom_call.1} parent=1 // pred_check
      _
    $region55: #{tpu_custom_call.1} parent=1 // pred_check_branch
      %2849 = sbr.rel (0) target = $region57
    $region56: #{tpu_custom_call.1} parent=1 // pred_region
      %2850 = dma.done [#allocation4], 128
    $region57: #{tpu_custom_call.1} parent=1 // pred_fallthru
      _
    %2851 = vsyncpa [#allocation3], 1
    %2852 = vsyncpa [#allocation6], 1
    %2853 = vsyncpa [#allocation9], 1
    %2854 = vsyncpa [#allocation4], 1

</llo_original>
